<compile_context>
chip_gen: v6e
topology: v6e:2x2x1
jax: 0.10.0
libtpu: 0.0.40
codegen_flags: <defaults>
</compile_context>

<pallas_src>
import jax
import jax.numpy as jnp
from jax.experimental import pallas as pl
from jax.experimental.pallas import tpu as pltpu

_LANE_DIM = 512                 # lane-dense last dim (multiple of 128)
_MAX_TILE_BYTES = 2 * 1024 * 1024   # per-buffer tile cap (double-buffered in+out => ~8 MiB VMEM)
_BYPASS_BYTES = 1 << 20         # below ~1 MiB, plain XLA elementwise is strictly better


def _relu_kernel(x_ref, o_ref):
    # Elementwise ReLU on the current VMEM tile (pure VPU op).
    o_ref[...] = jnp.maximum(x_ref[...], 0)


def relu_pallas(x):
    """Pallas implementation of F.relu(x) for any array shape."""
    orig_shape = x.shape
    dtype = x.dtype
    itemsize = jnp.dtype(dtype).itemsize
    nbytes = x.size * itemsize

    # Small-input bypass: launch overhead dominates; XLA's fused elementwise wins.
    if nbytes < _BYPASS_BYTES:
        return jnp.maximum(x, 0)

    # --- Lane-dense re-layout: flatten and view as (rows, _LANE_DIM). ---
    flat = x.reshape(-1)
    n = flat.shape[0]
    pad = (-n) % _LANE_DIM
    if pad:
        flat = jnp.pad(flat, (0, pad))          # ReLU(0) == 0, padding is harmless
    rows = flat.shape[0] // _LANE_DIM
    x2 = flat.reshape(rows, _LANE_DIM)

    # --- Row-tile size: as large as fits the VMEM budget, sublane-aligned. ---
    bytes_per_row = _LANE_DIM * itemsize
    sublane_mult = max(8, 32 // max(1, itemsize))   # f32 -> 8, bf16 -> 16, int8 -> 32
    tb = min(rows, max(sublane_mult, _MAX_TILE_BYTES // bytes_per_row))
    tb = max(sublane_mult, (tb // sublane_mult) * sublane_mult)
    tb = min(tb, rows)

    grid = (pl.cdiv(rows, tb),)

    out2 = pl.pallas_call(
        _relu_kernel,
        out_shape=jax.ShapeDtypeStruct((rows, _LANE_DIM), dtype),
        grid=grid,
        in_specs=[pl.BlockSpec((tb, _LANE_DIM), lambda i: (i, 0))],
        out_specs=pl.BlockSpec((tb, _LANE_DIM), lambda i: (i, 0)),
        compiler_params=pltpu.CompilerParams(
            dimension_semantics=("parallel",),   # shard row tiles across TCs (v7x)
        ),
        # TODO(synk): add input_output_aliases={0: 0} when the caller can donate x.
    )(x2)

    out_flat = out2.reshape(-1)
    if pad:
        out_flat = out_flat[:n]
    return out_flat.reshape(orig_shape)


class ReLuWrapperPallas:
    """JAX/Pallas equivalent of the PyTorch ReLuWrapper module."""

    def __init__(self, size):
        self.in_size = size
        self.out_size = size
        # buffer 'device_zero' equivalent (no learnable parameters in this module)
        self.device_zero = jnp.zeros((1,), dtype=jnp.float32)

    def get_initial_state(self, batch_size):
        return ()

    def get_initial_output(self, batch_size):
        return jnp.broadcast_to(self.device_zero, (batch_size, self.in_size))

    def forward(self, x, h):
        return (relu_pallas(x), ())


if __name__ == "__main__":
    k_small, k_large = jax.random.split(jax.random.PRNGKey(0))

    # 1) Small shape consistent with the module demo (batch=2, size=32).
    #    Takes the small-input fast path (semantics identical to F.relu).
    batch, size = 2, 32
    x_small = jax.random.normal(k_small, (batch, size), dtype=jnp.float32)
    module = ReLuWrapperPallas(size)
    h = module.get_initial_state(batch)
    out_small, new_h = module.forward(x_small, h)
    out_small = jax.block_until_ready(out_small)
    assert out_small.shape == (batch, size)
    assert out_small.dtype == x_small.dtype
    assert new_h == ()
    assert jnp.array_equal(out_small, jnp.maximum(x_small, 0.0)), "small-path mismatch"

    # 2) Larger input exercises the tiled, pipelined Pallas kernel (grid > 1).
    B, D = 1024, 2048   # 8 MiB f32 -> lane-dense (4096, 512), 4 row-tiles of 1024
    x_large = jax.random.normal(k_large, (B, D), dtype=jnp.float32)
    module_large = ReLuWrapperPallas(D)
    out_large, _ = module_large.forward(x_large, ())
    out_large = jax.block_until_ready(out_large)
    assert out_large.shape == (B, D)
    assert out_large.dtype == x_large.dtype
    assert jnp.array_equal(out_large, jnp.maximum(x_large, 0.0)), "Pallas ReLU mismatch"

    print("KERNEL_OK")
</pallas_src>

<mosaic_0001>
module attributes {stable_mosaic.version = 11 : i64} {
  func.func @_relu_kernel(%arg0: i32, %arg1: memref<1024x512xf32, #tpu.memory_space<vmem>>, %arg2: memref<1024x512xf32, #tpu.memory_space<vmem>>) attributes {dimension_semantics = [#tpu.dimension_semantics<parallel>], iteration_bounds = array<i64: 4>, scalar_prefetch = 0 : i64, scratch_operands = 0 : i64, tpu.core_type = #tpu.core_type<tc>, window_params = [{transform_indices = @transform_0, window_bounds = array<i64: 1024, 512>}, {transform_indices = @transform_1, window_bounds = array<i64: 1024, 512>}]} {
    %c0 = arith.constant 0 : index
    %c0_0 = arith.constant 0 : index
    %0 = vector.load %arg1[%c0, %c0_0] : memref<1024x512xf32, #tpu.memory_space<vmem>>, vector<1024x512xf32>
    %cst = arith.constant 0.000000e+00 : f32
    %1 = vector.broadcast %cst : f32 to vector<1024x512xf32>
    %2 = arith.maximumf %0, %1 : vector<1024x512xf32>
    %c0_1 = arith.constant 0 : index
    %c0_2 = arith.constant 0 : index
    %3 = vector.load %arg2[%c0_1, %c0_2] : memref<1024x512xf32, #tpu.memory_space<vmem>>, vector<1024x512xf32>
    tpu.vector_store %arg2[%c0_1, %c0_2], %2 {strides = array<i32>} : memref<1024x512xf32, #tpu.memory_space<vmem>>, vector<1024x512xf32>,
    return
  }
  func.func @transform_0(%arg0: i32) -> (i32, i32) {
    %c0_i32 = arith.constant 0 : i32
    %c0_i32_0 = arith.constant 0 : i32
    return %arg0, %c0_i32 : i32, i32
  }
  func.func @transform_1(%arg0: i32) -> (i32, i32) {
    %c0_i32 = arith.constant 0 : i32
    %c0_i32_0 = arith.constant 0 : i32
    return %arg0, %c0_i32 : i32, i32
  }
}

</mosaic_0001>

<llo_original>
// kernel: tpu_custom_call.1
$region0: #{tpu_custom_call.1}
  #allocation0 [shape = 'u32[]', space=smem, size = 0x4, offset = 0x4, fixed_abs, tag = 'smem constant byte address 0x4 - core index']
  #allocation1 [shape = 'u32[144,128]{1,0:T(1,128)}', space=vmem, size = 0x12000, scoped, tag = 'internal scratch']
  %s0 = inlined_call_operand.hbm [shape: f32[4096,512], index: 0, kind: input, shape index: {}]
  %s1 = inlined_call_operand.hbm [shape: f32[4096,512], index: 1, kind: output, shape index: {}]
  %s2 = sld [smem:[#allocation0]]
  $region41: #{tpu_custom_call.1} parent=0
    _
  %s4 = ssub.s32 1, %s2
  %s5 = scalar_select 0, %s4, %s2
  $region1: #{tpu_custom_call.1} parent=0
    #allocation2 [shape = 'u8[4194304]{0}', space=vmem, size = 0x400000, scoped, tag = 'input window, operand 0']
    #allocation3 [shape = 's32[2]{0}', space=sflag, size = 0x8, scoped, tag = 'scoped memory for tpu_custom_call.1']
    #allocation4 [shape = 's32[2]{0}', space=sflag, size = 0x8, scoped, tag = 'scoped memory for tpu_custom_call.1']
    #allocation5 [shape = 'u8[4194304]{0}', space=vmem, size = 0x400000, scoped, tag = 'output window, operand 0']
    %6 = vsyncpa [#allocation3], 0
    %s7 = scalar_lea.sflag [#allocation3], 1
    %8 = vsyncpa %s7, 0
    %9 = vsyncpa [#allocation4], 0
    %s10 = scalar_lea.sflag [#allocation4], 1
    %11 = vsyncpa %s10, 0
    loop: start=0, step=1, limit=6
    $region2: #{tpu_custom_call.1} parent=1 // loop_pre_header
      _
    $region3: #{tpu_custom_call.1} parent=1 // loop_header
      %s13 = sphi 0, %s17
      %p14 = scmp.ge.s32.totalorder %s13, 6
      %s23 = sphi 0, %s25
      %s26 = sphi 0, %s23
      %s27 = sphi 0, %s26
      %s43 = sphi 0, %s27
      %s49 = sphi 0, %s51
      %s52 = sphi 0, %s49
      %s53 = sphi 0, %s52
      %s69 = sphi 0, %s53
    $region4: #{tpu_custom_call.1} parent=1 // loop_header_branch
      %16 = sbr.rel (%p14) target = $region8
    $region5: #{tpu_custom_call.1} parent=1 // loop_body
      %s18 = ssub.s32 %s13, 1
      %s19 = ssub.s32 %s13, 2
      %s20 = sadd.s32 %s13, 1
      %s21 = ssub.s32 %s13, %s20
      %p22 = scmp.eq.s32.totalorder %s21, 0
      %s24 = sadd.s32 %s23, 1
      %s25 = scalar_select %p22, %s23, %s24
      %p28 = pneg %p22
      %p29 = scmp.eq.s32.totalorder %s13, 3
      %p30 = por %p28, %p29
      %p31 = scmp.ne.s32.totalorder %s23, %s26
      %p32 = scmp.eq.s32.totalorder %s13, 0
      %p33 = por %p31, %p32
      %p34 = scmp.ne.s32.totalorder %s23, %s26
      %p35 = scmp.eq.s32.totalorder %s18, 3
      %p36 = por %p34, %p35
      %p37 = scmp.ne.s32.totalorder %s26, %s27
      %p38 = scmp.eq.s32.totalorder %s18, 0
      %p39 = por %p37, %p38
      %p40 = scmp.ne.s32.totalorder %s26, %s27
      %p41 = scmp.eq.s32.totalorder %s19, 3
      %p42 = por %p40, %p41
      %p44 = scmp.ne.s32.totalorder %s27, %s43
      %p45 = scmp.eq.s32.totalorder %s19, 0
      %p46 = por %p44, %p45
      %s47 = ssub.s32 %s13, %s20
      %p48 = scmp.eq.s32.totalorder %s47, 0
      %s50 = sadd.s32 %s49, 1
      %s51 = scalar_select %p48, %s49, %s50
      %p54 = pneg %p48
      %p55 = scmp.eq.s32.totalorder %s13, 3
      %p56 = por %p54, %p55
      %p57 = scmp.ne.s32.totalorder %s49, %s52
      %p58 = scmp.eq.s32.totalorder %s13, 0
      %p59 = por %p57, %p58
      %p60 = scmp.ne.s32.totalorder %s49, %s52
      %p61 = scmp.eq.s32.totalorder %s18, 3
      %p62 = por %p60, %p61
      %p63 = scmp.ne.s32.totalorder %s52, %s53
      %p64 = scmp.eq.s32.totalorder %s18, 0
      %p65 = por %p63, %p64
      %p66 = scmp.ne.s32.totalorder %s52, %s53
      %p67 = scmp.eq.s32.totalorder %s19, 3
      %p68 = por %p66, %p67
      %p70 = scmp.ne.s32.totalorder %s53, %s69
      %p71 = scmp.eq.s32.totalorder %s19, 0
      %p72 = por %p70, %p71
      %p73 = scmp.le.s32.totalorder 1, %s13
      %p74 = scmp.lt.s32.totalorder %s13, 5
      %p75 = pnand %p73, %p74
      %p76 = pneg %p75
      // Predicated region
      $region9: #{tpu_custom_call.1} parent=5 // pred_check
        _
      $region10: #{tpu_custom_call.1} parent=5 // pred_check_branch
        %78 = sbr.rel (%p75) target = $region12
      $region11: #{tpu_custom_call.1} parent=5 // pred_region
        %s79 = ssub.s32 %s13, 1
      $region12: #{tpu_custom_call.1} parent=5 // pred_fallthru
        _
      %p80 = scmp.lt.s32.totalorder %s13, 4
      // Predicated region
      $region13: #{tpu_custom_call.1} parent=5 // pred_check
        %p81 = pneg %p80
      $region14: #{tpu_custom_call.1} parent=5 // pred_check_branch
        %83 = sbr.rel (%p81) target = $region16
      $region15: #{tpu_custom_call.1} parent=5 // pred_region
        // Predicated region
        $region17: #{tpu_custom_call.1} parent=15 // pred_check
          %p84 = pneg %p33
        $region18: #{tpu_custom_call.1} parent=15 // pred_check_branch
          %86 = sbr.rel (%p84) target = $region20
        $region19: #{tpu_custom_call.1} parent=15 // pred_region
          %s87 = sand.u32 %s23, 1
          %s88 = scalar_lea.sflag [#allocation3], %s87
          %s89 = sand.u32 %s23, 1
          %s90 = smul.addr %s89, 4096
          %s91 = scalar_lea.vmem [#allocation2], %s90
          %s92 = smul.u32 128, %s13
          %s94 = ssub.s32 65536, 65536
          %95 = vsyncadd %s88, %s94
          %s96 = smul.addr %s92, 4
          %s97 = smul.addr %s96, 128
          %s98 = scalar_lea.hbm %s0, %s97
          %s99 = sshll.u32 %s91, 4
          %s100 = int_to_ptr.vmem [resolvable:$true] %s99
          %105 = dma.hbm_to_vmem [thread:$0]  %s98, 65536, %s100, %s88, 512, 512, 32
        $region20: #{tpu_custom_call.1} parent=15 // pred_fallthru
          _
      $region16: #{tpu_custom_call.1} parent=5 // pred_fallthru
        _
      %p106 = scmp.le.s32.totalorder 1, %s13
      %p107 = scmp.lt.s32.totalorder %s13, 5
      %p108 = pnand %p106, %p107
      %p109 = pneg %p108
      // Predicated region
      $region21: #{tpu_custom_call.1} parent=5 // pred_check
        _
      $region22: #{tpu_custom_call.1} parent=5 // pred_check_branch
        %111 = sbr.rel (%p108) target = $region24
      $region23: #{tpu_custom_call.1} parent=5 // pred_region
        %s112 = ssub.s32 %s13, 1
        %s113 = sand.u32 %s26, 1
        %s114 = scalar_lea.sflag [#allocation3], %s113
        %s115 = sand.u32 %s26, 1
        %s116 = smul.addr %s115, 4096
        %s117 = scalar_lea.vmem [#allocation2], %s116
        // Predicated region
        $region25: #{tpu_custom_call.1} parent=23 // pred_check
          %p118 = pneg %p39
        $region26: #{tpu_custom_call.1} parent=23 // pred_check_branch
          %120 = sbr.rel (%p118) target = $region28
        $region27: #{tpu_custom_call.1} parent=23 // pred_region
          %121 = dma.done %s114, 65536
        $region28: #{tpu_custom_call.1} parent=23 // pred_fallthru
          _
        %s122 = sand.u32 %s26, 1
        %s123 = scalar_lea.sflag [#allocation3], %s122
        %s124 = sand.u32 %s26, 1
        %s125 = smul.addr %s124, 4096
        %s126 = scalar_lea.vmem [#allocation2], %s125
        %p127 = pneg %p39
        %p128 = pneg %p36
        %p129 = pneg %p65
        %p130 = pneg %p62
        %s131 = sand.u32 %s52, 1
        %s132 = scalar_lea.sflag [#allocation4], %s131
        %s133 = sand.u32 %s52, 1
        %s134 = smul.addr %s133, 4096
        %s135 = scalar_lea.vmem [#allocation5], %s134
        %s136 = smul.u32 128, %s18
        %s137 = smul.u32 128, %s18
        %v138 = vld [vmem:[%s117] sm:$0xff]
        %v139 = vld [vmem:[%s117 + $0x8] sm:$0xff]
        %v140 = vld [vmem:[%s117 + $0x10] sm:$0xff]
        %v141 = vld [vmem:[%s117 + $0x18] sm:$0xff]
        %v142 = vld [vmem:[%s117 + $0x20] sm:$0xff]
        %v143 = vld [vmem:[%s117 + $0x28] sm:$0xff]
        %v144 = vld [vmem:[%s117 + $0x30] sm:$0xff]
        %v145 = vld [vmem:[%s117 + $0x38] sm:$0xff]
        %v146 = vld [vmem:[%s117 + $0x40] sm:$0xff]
        %v147 = vld [vmem:[%s117 + $0x48] sm:$0xff]
        %v148 = vld [vmem:[%s117 + $0x50] sm:$0xff]
        %v149 = vld [vmem:[%s117 + $0x58] sm:$0xff]
        %v150 = vld [vmem:[%s117 + $0x60] sm:$0xff]
        %v151 = vld [vmem:[%s117 + $0x68] sm:$0xff]
        %v152 = vld [vmem:[%s117 + $0x70] sm:$0xff]
        %v153 = vld [vmem:[%s117 + $0x78] sm:$0xff]
        %v154 = vld [vmem:[%s117 + $0x80] sm:$0xff]
        %v155 = vld [vmem:[%s117 + $0x88] sm:$0xff]
        %v156 = vld [vmem:[%s117 + $0x90] sm:$0xff]
        %v157 = vld [vmem:[%s117 + $0x98] sm:$0xff]
        %v158 = vld [vmem:[%s117 + $0xa0] sm:$0xff]
        %v159 = vld [vmem:[%s117 + $0xa8] sm:$0xff]
        %v160 = vld [vmem:[%s117 + $0xb0] sm:$0xff]
        %v161 = vld [vmem:[%s117 + $0xb8] sm:$0xff]
        %v162 = vld [vmem:[%s117 + $0xc0] sm:$0xff]
        %v163 = vld [vmem:[%s117 + $0xc8] sm:$0xff]
        %v164 = vld [vmem:[%s117 + $0xd0] sm:$0xff]
        %v165 = vld [vmem:[%s117 + $0xd8] sm:$0xff]
        %v166 = vld [vmem:[%s117 + $0xe0] sm:$0xff]
        %v167 = vld [vmem:[%s117 + $0xe8] sm:$0xff]
        %v168 = vld [vmem:[%s117 + $0xf0] sm:$0xff]
        %v169 = vld [vmem:[%s117 + $0xf8] sm:$0xff]
        %v170 = vld [vmem:[%s117 + $0x100] sm:$0xff]
        %v171 = vld [vmem:[%s117 + $0x108] sm:$0xff]
        %v172 = vld [vmem:[%s117 + $0x110] sm:$0xff]
        %v173 = vld [vmem:[%s117 + $0x118] sm:$0xff]
        %v174 = vld [vmem:[%s117 + $0x120] sm:$0xff]
        %v175 = vld [vmem:[%s117 + $0x128] sm:$0xff]
        %v176 = vld [vmem:[%s117 + $0x130] sm:$0xff]
        %v177 = vld [vmem:[%s117 + $0x138] sm:$0xff]
        %v178 = vld [vmem:[%s117 + $0x140] sm:$0xff]
        %v179 = vld [vmem:[%s117 + $0x148] sm:$0xff]
        %v180 = vld [vmem:[%s117 + $0x150] sm:$0xff]
        %v181 = vld [vmem:[%s117 + $0x158] sm:$0xff]
        %v182 = vld [vmem:[%s117 + $0x160] sm:$0xff]
        %v183 = vld [vmem:[%s117 + $0x168] sm:$0xff]
        %v184 = vld [vmem:[%s117 + $0x170] sm:$0xff]
        %v185 = vld [vmem:[%s117 + $0x178] sm:$0xff]
        %v186 = vld [vmem:[%s117 + $0x180] sm:$0xff]
        %v187 = vld [vmem:[%s117 + $0x188] sm:$0xff]
        %v188 = vld [vmem:[%s117 + $0x190] sm:$0xff]
        %v189 = vld [vmem:[%s117 + $0x198] sm:$0xff]
        %v190 = vld [vmem:[%s117 + $0x1a0] sm:$0xff]
        %v191 = vld [vmem:[%s117 + $0x1a8] sm:$0xff]
        %v192 = vld [vmem:[%s117 + $0x1b0] sm:$0xff]
        %v193 = vld [vmem:[%s117 + $0x1b8] sm:$0xff]
        %v194 = vld [vmem:[%s117 + $0x1c0] sm:$0xff]
        %v195 = vld [vmem:[%s117 + $0x1c8] sm:$0xff]
        %v196 = vld [vmem:[%s117 + $0x1d0] sm:$0xff]
        %v197 = vld [vmem:[%s117 + $0x1d8] sm:$0xff]
        %v198 = vld [vmem:[%s117 + $0x1e0] sm:$0xff]
        %v199 = vld [vmem:[%s117 + $0x1e8] sm:$0xff]
        %v200 = vld [vmem:[%s117 + $0x1f0] sm:$0xff]
        %v201 = vld [vmem:[%s117 + $0x1f8] sm:$0xff]
        %v202 = vld [vmem:[%s117 + $0x200] sm:$0xff]
        %v203 = vld [vmem:[%s117 + $0x208] sm:$0xff]
        %v204 = vld [vmem:[%s117 + $0x210] sm:$0xff]
        %v205 = vld [vmem:[%s117 + $0x218] sm:$0xff]
        %v206 = vld [vmem:[%s117 + $0x220] sm:$0xff]
        %v207 = vld [vmem:[%s117 + $0x228] sm:$0xff]
        %v208 = vld [vmem:[%s117 + $0x230] sm:$0xff]
        %v209 = vld [vmem:[%s117 + $0x238] sm:$0xff]
        %v210 = vld [vmem:[%s117 + $0x240] sm:$0xff]
        %v211 = vld [vmem:[%s117 + $0x248] sm:$0xff]
        %v212 = vld [vmem:[%s117 + $0x250] sm:$0xff]
        %v213 = vld [vmem:[%s117 + $0x258] sm:$0xff]
        %v214 = vld [vmem:[%s117 + $0x260] sm:$0xff]
        %v215 = vld [vmem:[%s117 + $0x268] sm:$0xff]
        %v216 = vld [vmem:[%s117 + $0x270] sm:$0xff]
        %v217 = vld [vmem:[%s117 + $0x278] sm:$0xff]
        %v218 = vld [vmem:[%s117 + $0x280] sm:$0xff]
        %v219 = vld [vmem:[%s117 + $0x288] sm:$0xff]
        %v220 = vld [vmem:[%s117 + $0x290] sm:$0xff]
        %v221 = vld [vmem:[%s117 + $0x298] sm:$0xff]
        %v222 = vld [vmem:[%s117 + $0x2a0] sm:$0xff]
        %v223 = vld [vmem:[%s117 + $0x2a8] sm:$0xff]
        %v224 = vld [vmem:[%s117 + $0x2b0] sm:$0xff]
        %v225 = vld [vmem:[%s117 + $0x2b8] sm:$0xff]
        %v226 = vld [vmem:[%s117 + $0x2c0] sm:$0xff]
        %v227 = vld [vmem:[%s117 + $0x2c8] sm:$0xff]
        %v228 = vld [vmem:[%s117 + $0x2d0] sm:$0xff]
        %v229 = vld [vmem:[%s117 + $0x2d8] sm:$0xff]
        %v230 = vld [vmem:[%s117 + $0x2e0] sm:$0xff]
        %v231 = vld [vmem:[%s117 + $0x2e8] sm:$0xff]
        %v232 = vld [vmem:[%s117 + $0x2f0] sm:$0xff]
        %v233 = vld [vmem:[%s117 + $0x2f8] sm:$0xff]
        %v234 = vld [vmem:[%s117 + $0x300] sm:$0xff]
        %v235 = vld [vmem:[%s117 + $0x308] sm:$0xff]
        %v236 = vld [vmem:[%s117 + $0x310] sm:$0xff]
        %v237 = vld [vmem:[%s117 + $0x318] sm:$0xff]
        %v238 = vld [vmem:[%s117 + $0x320] sm:$0xff]
        %v239 = vld [vmem:[%s117 + $0x328] sm:$0xff]
        %v240 = vld [vmem:[%s117 + $0x330] sm:$0xff]
        %v241 = vld [vmem:[%s117 + $0x338] sm:$0xff]
        %v242 = vld [vmem:[%s117 + $0x340] sm:$0xff]
        %v243 = vld [vmem:[%s117 + $0x348] sm:$0xff]
        %v244 = vld [vmem:[%s117 + $0x350] sm:$0xff]
        %v245 = vld [vmem:[%s117 + $0x358] sm:$0xff]
        %v246 = vld [vmem:[%s117 + $0x360] sm:$0xff]
        %v247 = vld [vmem:[%s117 + $0x368] sm:$0xff]
        %v248 = vld [vmem:[%s117 + $0x370] sm:$0xff]
        %v249 = vld [vmem:[%s117 + $0x378] sm:$0xff]
        %v250 = vld [vmem:[%s117 + $0x380] sm:$0xff]
        %v251 = vld [vmem:[%s117 + $0x388] sm:$0xff]
        %v252 = vld [vmem:[%s117 + $0x390] sm:$0xff]
        %v253 = vld [vmem:[%s117 + $0x398] sm:$0xff]
        %v254 = vld [vmem:[%s117 + $0x3a0] sm:$0xff]
        %v255 = vld [vmem:[%s117 + $0x3a8] sm:$0xff]
        %v256 = vld [vmem:[%s117 + $0x3b0] sm:$0xff]
        %v257 = vld [vmem:[%s117 + $0x3b8] sm:$0xff]
        %v258 = vld [vmem:[%s117 + $0x3c0] sm:$0xff]
        %v259 = vld [vmem:[%s117 + $0x3c8] sm:$0xff]
        %v260 = vld [vmem:[%s117 + $0x3d0] sm:$0xff]
        %v261 = vld [vmem:[%s117 + $0x3d8] sm:$0xff]
        %v262 = vld [vmem:[%s117 + $0x3e0] sm:$0xff]
        %v263 = vld [vmem:[%s117 + $0x3e8] sm:$0xff]
        %v264 = vld [vmem:[%s117 + $0x3f0] sm:$0xff]
        %v265 = vld [vmem:[%s117 + $0x3f8] sm:$0xff]
        %v266 = vld [vmem:[%s117 + $0x400] sm:$0xff]
        %v267 = vld [vmem:[%s117 + $0x408] sm:$0xff]
        %v268 = vld [vmem:[%s117 + $0x410] sm:$0xff]
        %v269 = vld [vmem:[%s117 + $0x418] sm:$0xff]
        %v270 = vld [vmem:[%s117 + $0x420] sm:$0xff]
        %v271 = vld [vmem:[%s117 + $0x428] sm:$0xff]
        %v272 = vld [vmem:[%s117 + $0x430] sm:$0xff]
        %v273 = vld [vmem:[%s117 + $0x438] sm:$0xff]
        %v274 = vld [vmem:[%s117 + $0x440] sm:$0xff]
        %v275 = vld [vmem:[%s117 + $0x448] sm:$0xff]
        %v276 = vld [vmem:[%s117 + $0x450] sm:$0xff]
        %v277 = vld [vmem:[%s117 + $0x458] sm:$0xff]
        %v278 = vld [vmem:[%s117 + $0x460] sm:$0xff]
        %v279 = vld [vmem:[%s117 + $0x468] sm:$0xff]
        %v280 = vld [vmem:[%s117 + $0x470] sm:$0xff]
        %v281 = vld [vmem:[%s117 + $0x478] sm:$0xff]
        %v282 = vld [vmem:[%s117 + $0x480] sm:$0xff]
        %v283 = vld [vmem:[%s117 + $0x488] sm:$0xff]
        %v284 = vld [vmem:[%s117 + $0x490] sm:$0xff]
        %v285 = vld [vmem:[%s117 + $0x498] sm:$0xff]
        %v286 = vld [vmem:[%s117 + $0x4a0] sm:$0xff]
        %v287 = vld [vmem:[%s117 + $0x4a8] sm:$0xff]
        %v288 = vld [vmem:[%s117 + $0x4b0] sm:$0xff]
        %v289 = vld [vmem:[%s117 + $0x4b8] sm:$0xff]
        %v290 = vld [vmem:[%s117 + $0x4c0] sm:$0xff]
        %v291 = vld [vmem:[%s117 + $0x4c8] sm:$0xff]
        %v292 = vld [vmem:[%s117 + $0x4d0] sm:$0xff]
        %v293 = vld [vmem:[%s117 + $0x4d8] sm:$0xff]
        %v294 = vld [vmem:[%s117 + $0x4e0] sm:$0xff]
        %v295 = vld [vmem:[%s117 + $0x4e8] sm:$0xff]
        %v296 = vld [vmem:[%s117 + $0x4f0] sm:$0xff]
        %v297 = vld [vmem:[%s117 + $0x4f8] sm:$0xff]
        %v298 = vld [vmem:[%s117 + $0x500] sm:$0xff]
        %v299 = vld [vmem:[%s117 + $0x508] sm:$0xff]
        %v300 = vld [vmem:[%s117 + $0x510] sm:$0xff]
        %v301 = vld [vmem:[%s117 + $0x518] sm:$0xff]
        %v302 = vld [vmem:[%s117 + $0x520] sm:$0xff]
        %v303 = vld [vmem:[%s117 + $0x528] sm:$0xff]
        %v304 = vld [vmem:[%s117 + $0x530] sm:$0xff]
        %v305 = vld [vmem:[%s117 + $0x538] sm:$0xff]
        %v306 = vld [vmem:[%s117 + $0x540] sm:$0xff]
        %v307 = vld [vmem:[%s117 + $0x548] sm:$0xff]
        %v308 = vld [vmem:[%s117 + $0x550] sm:$0xff]
        %v309 = vld [vmem:[%s117 + $0x558] sm:$0xff]
        %v310 = vld [vmem:[%s117 + $0x560] sm:$0xff]
        %v311 = vld [vmem:[%s117 + $0x568] sm:$0xff]
        %v312 = vld [vmem:[%s117 + $0x570] sm:$0xff]
        %v313 = vld [vmem:[%s117 + $0x578] sm:$0xff]
        %v314 = vld [vmem:[%s117 + $0x580] sm:$0xff]
        %v315 = vld [vmem:[%s117 + $0x588] sm:$0xff]
        %v316 = vld [vmem:[%s117 + $0x590] sm:$0xff]
        %v317 = vld [vmem:[%s117 + $0x598] sm:$0xff]
        %v318 = vld [vmem:[%s117 + $0x5a0] sm:$0xff]
        %v319 = vld [vmem:[%s117 + $0x5a8] sm:$0xff]
        %v320 = vld [vmem:[%s117 + $0x5b0] sm:$0xff]
        %v321 = vld [vmem:[%s117 + $0x5b8] sm:$0xff]
        %v322 = vld [vmem:[%s117 + $0x5c0] sm:$0xff]
        %v323 = vld [vmem:[%s117 + $0x5c8] sm:$0xff]
        %v324 = vld [vmem:[%s117 + $0x5d0] sm:$0xff]
        %v325 = vld [vmem:[%s117 + $0x5d8] sm:$0xff]
        %v326 = vld [vmem:[%s117 + $0x5e0] sm:$0xff]
        %v327 = vld [vmem:[%s117 + $0x5e8] sm:$0xff]
        %v328 = vld [vmem:[%s117 + $0x5f0] sm:$0xff]
        %v329 = vld [vmem:[%s117 + $0x5f8] sm:$0xff]
        %v330 = vld [vmem:[%s117 + $0x600] sm:$0xff]
        %v331 = vld [vmem:[%s117 + $0x608] sm:$0xff]
        %v332 = vld [vmem:[%s117 + $0x610] sm:$0xff]
        %v333 = vld [vmem:[%s117 + $0x618] sm:$0xff]
        %v334 = vld [vmem:[%s117 + $0x620] sm:$0xff]
        %v335 = vld [vmem:[%s117 + $0x628] sm:$0xff]
        %v336 = vld [vmem:[%s117 + $0x630] sm:$0xff]
        %v337 = vld [vmem:[%s117 + $0x638] sm:$0xff]
        %v338 = vld [vmem:[%s117 + $0x640] sm:$0xff]
        %v339 = vld [vmem:[%s117 + $0x648] sm:$0xff]
        %v340 = vld [vmem:[%s117 + $0x650] sm:$0xff]
        %v341 = vld [vmem:[%s117 + $0x658] sm:$0xff]
        %v342 = vld [vmem:[%s117 + $0x660] sm:$0xff]
        %v343 = vld [vmem:[%s117 + $0x668] sm:$0xff]
        %v344 = vld [vmem:[%s117 + $0x670] sm:$0xff]
        %v345 = vld [vmem:[%s117 + $0x678] sm:$0xff]
        %v346 = vld [vmem:[%s117 + $0x680] sm:$0xff]
        %v347 = vld [vmem:[%s117 + $0x688] sm:$0xff]
        %v348 = vld [vmem:[%s117 + $0x690] sm:$0xff]
        %v349 = vld [vmem:[%s117 + $0x698] sm:$0xff]
        %v350 = vld [vmem:[%s117 + $0x6a0] sm:$0xff]
        %v351 = vld [vmem:[%s117 + $0x6a8] sm:$0xff]
        %v352 = vld [vmem:[%s117 + $0x6b0] sm:$0xff]
        %v353 = vld [vmem:[%s117 + $0x6b8] sm:$0xff]
        %v354 = vld [vmem:[%s117 + $0x6c0] sm:$0xff]
        %v355 = vld [vmem:[%s117 + $0x6c8] sm:$0xff]
        %v356 = vld [vmem:[%s117 + $0x6d0] sm:$0xff]
        %v357 = vld [vmem:[%s117 + $0x6d8] sm:$0xff]
        %v358 = vld [vmem:[%s117 + $0x6e0] sm:$0xff]
        %v359 = vld [vmem:[%s117 + $0x6e8] sm:$0xff]
        %v360 = vld [vmem:[%s117 + $0x6f0] sm:$0xff]
        %v361 = vld [vmem:[%s117 + $0x6f8] sm:$0xff]
        %v362 = vld [vmem:[%s117 + $0x700] sm:$0xff]
        %v363 = vld [vmem:[%s117 + $0x708] sm:$0xff]
        %v364 = vld [vmem:[%s117 + $0x710] sm:$0xff]
        %v365 = vld [vmem:[%s117 + $0x718] sm:$0xff]
        %v366 = vld [vmem:[%s117 + $0x720] sm:$0xff]
        %v367 = vld [vmem:[%s117 + $0x728] sm:$0xff]
        %v368 = vld [vmem:[%s117 + $0x730] sm:$0xff]
        %v369 = vld [vmem:[%s117 + $0x738] sm:$0xff]
        %v370 = vld [vmem:[%s117 + $0x740] sm:$0xff]
        %v371 = vld [vmem:[%s117 + $0x748] sm:$0xff]
        %v372 = vld [vmem:[%s117 + $0x750] sm:$0xff]
        %v373 = vld [vmem:[%s117 + $0x758] sm:$0xff]
        %v374 = vld [vmem:[%s117 + $0x760] sm:$0xff]
        %v375 = vld [vmem:[%s117 + $0x768] sm:$0xff]
        %v376 = vld [vmem:[%s117 + $0x770] sm:$0xff]
        %v377 = vld [vmem:[%s117 + $0x778] sm:$0xff]
        %v378 = vld [vmem:[%s117 + $0x780] sm:$0xff]
        %v379 = vld [vmem:[%s117 + $0x788] sm:$0xff]
        %v380 = vld [vmem:[%s117 + $0x790] sm:$0xff]
        %v381 = vld [vmem:[%s117 + $0x798] sm:$0xff]
        %v382 = vld [vmem:[%s117 + $0x7a0] sm:$0xff]
        %v383 = vld [vmem:[%s117 + $0x7a8] sm:$0xff]
        %v384 = vld [vmem:[%s117 + $0x7b0] sm:$0xff]
        %v385 = vld [vmem:[%s117 + $0x7b8] sm:$0xff]
        %v386 = vld [vmem:[%s117 + $0x7c0] sm:$0xff]
        %v387 = vld [vmem:[%s117 + $0x7c8] sm:$0xff]
        %v388 = vld [vmem:[%s117 + $0x7d0] sm:$0xff]
        %v389 = vld [vmem:[%s117 + $0x7d8] sm:$0xff]
        %v390 = vld [vmem:[%s117 + $0x7e0] sm:$0xff]
        %v391 = vld [vmem:[%s117 + $0x7e8] sm:$0xff]
        %v392 = vld [vmem:[%s117 + $0x7f0] sm:$0xff]
        %v393 = vld [vmem:[%s117 + $0x7f8] sm:$0xff]
        %v394 = vld [vmem:[%s117 + $0x800] sm:$0xff]
        %v395 = vld [vmem:[%s117 + $0x808] sm:$0xff]
        %v396 = vld [vmem:[%s117 + $0x810] sm:$0xff]
        %v397 = vld [vmem:[%s117 + $0x818] sm:$0xff]
        %v398 = vld [vmem:[%s117 + $0x820] sm:$0xff]
        %v399 = vld [vmem:[%s117 + $0x828] sm:$0xff]
        %v400 = vld [vmem:[%s117 + $0x830] sm:$0xff]
        %v401 = vld [vmem:[%s117 + $0x838] sm:$0xff]
        %v402 = vld [vmem:[%s117 + $0x840] sm:$0xff]
        %v403 = vld [vmem:[%s117 + $0x848] sm:$0xff]
        %v404 = vld [vmem:[%s117 + $0x850] sm:$0xff]
        %v405 = vld [vmem:[%s117 + $0x858] sm:$0xff]
        %v406 = vld [vmem:[%s117 + $0x860] sm:$0xff]
        %v407 = vld [vmem:[%s117 + $0x868] sm:$0xff]
        %v408 = vld [vmem:[%s117 + $0x870] sm:$0xff]
        %v409 = vld [vmem:[%s117 + $0x878] sm:$0xff]
        %v410 = vld [vmem:[%s117 + $0x880] sm:$0xff]
        %v411 = vld [vmem:[%s117 + $0x888] sm:$0xff]
        %v412 = vld [vmem:[%s117 + $0x890] sm:$0xff]
        %v413 = vld [vmem:[%s117 + $0x898] sm:$0xff]
        %v414 = vld [vmem:[%s117 + $0x8a0] sm:$0xff]
        %v415 = vld [vmem:[%s117 + $0x8a8] sm:$0xff]
        %v416 = vld [vmem:[%s117 + $0x8b0] sm:$0xff]
        %v417 = vld [vmem:[%s117 + $0x8b8] sm:$0xff]
        %v418 = vld [vmem:[%s117 + $0x8c0] sm:$0xff]
        %v419 = vld [vmem:[%s117 + $0x8c8] sm:$0xff]
        %v420 = vld [vmem:[%s117 + $0x8d0] sm:$0xff]
        %v421 = vld [vmem:[%s117 + $0x8d8] sm:$0xff]
        %v422 = vld [vmem:[%s117 + $0x8e0] sm:$0xff]
        %v423 = vld [vmem:[%s117 + $0x8e8] sm:$0xff]
        %v424 = vld [vmem:[%s117 + $0x8f0] sm:$0xff]
        %v425 = vld [vmem:[%s117 + $0x8f8] sm:$0xff]
        %v426 = vld [vmem:[%s117 + $0x900] sm:$0xff]
        %v427 = vld [vmem:[%s117 + $0x908] sm:$0xff]
        %v428 = vld [vmem:[%s117 + $0x910] sm:$0xff]
        %v429 = vld [vmem:[%s117 + $0x918] sm:$0xff]
        %v430 = vld [vmem:[%s117 + $0x920] sm:$0xff]
        %v431 = vld [vmem:[%s117 + $0x928] sm:$0xff]
        %v432 = vld [vmem:[%s117 + $0x930] sm:$0xff]
        %v433 = vld [vmem:[%s117 + $0x938] sm:$0xff]
        %v434 = vld [vmem:[%s117 + $0x940] sm:$0xff]
        %v435 = vld [vmem:[%s117 + $0x948] sm:$0xff]
        %v436 = vld [vmem:[%s117 + $0x950] sm:$0xff]
        %v437 = vld [vmem:[%s117 + $0x958] sm:$0xff]
        %v438 = vld [vmem:[%s117 + $0x960] sm:$0xff]
        %v439 = vld [vmem:[%s117 + $0x968] sm:$0xff]
        %v440 = vld [vmem:[%s117 + $0x970] sm:$0xff]
        %v441 = vld [vmem:[%s117 + $0x978] sm:$0xff]
        %v442 = vld [vmem:[%s117 + $0x980] sm:$0xff]
        %v443 = vld [vmem:[%s117 + $0x988] sm:$0xff]
        %v444 = vld [vmem:[%s117 + $0x990] sm:$0xff]
        %v445 = vld [vmem:[%s117 + $0x998] sm:$0xff]
        %v446 = vld [vmem:[%s117 + $0x9a0] sm:$0xff]
        %v447 = vld [vmem:[%s117 + $0x9a8] sm:$0xff]
        %v448 = vld [vmem:[%s117 + $0x9b0] sm:$0xff]
        %v449 = vld [vmem:[%s117 + $0x9b8] sm:$0xff]
        %v450 = vld [vmem:[%s117 + $0x9c0] sm:$0xff]
        %v451 = vld [vmem:[%s117 + $0x9c8] sm:$0xff]
        %v452 = vld [vmem:[%s117 + $0x9d0] sm:$0xff]
        %v453 = vld [vmem:[%s117 + $0x9d8] sm:$0xff]
        %v454 = vld [vmem:[%s117 + $0x9e0] sm:$0xff]
        %v455 = vld [vmem:[%s117 + $0x9e8] sm:$0xff]
        %v456 = vld [vmem:[%s117 + $0x9f0] sm:$0xff]
        %v457 = vld [vmem:[%s117 + $0x9f8] sm:$0xff]
        %v458 = vld [vmem:[%s117 + $0xa00] sm:$0xff]
        %v459 = vld [vmem:[%s117 + $0xa08] sm:$0xff]
        %v460 = vld [vmem:[%s117 + $0xa10] sm:$0xff]
        %v461 = vld [vmem:[%s117 + $0xa18] sm:$0xff]
        %v462 = vld [vmem:[%s117 + $0xa20] sm:$0xff]
        %v463 = vld [vmem:[%s117 + $0xa28] sm:$0xff]
        %v464 = vld [vmem:[%s117 + $0xa30] sm:$0xff]
        %v465 = vld [vmem:[%s117 + $0xa38] sm:$0xff]
        %v466 = vld [vmem:[%s117 + $0xa40] sm:$0xff]
        %v467 = vld [vmem:[%s117 + $0xa48] sm:$0xff]
        %v468 = vld [vmem:[%s117 + $0xa50] sm:$0xff]
        %v469 = vld [vmem:[%s117 + $0xa58] sm:$0xff]
        %v470 = vld [vmem:[%s117 + $0xa60] sm:$0xff]
        %v471 = vld [vmem:[%s117 + $0xa68] sm:$0xff]
        %v472 = vld [vmem:[%s117 + $0xa70] sm:$0xff]
        %v473 = vld [vmem:[%s117 + $0xa78] sm:$0xff]
        %v474 = vld [vmem:[%s117 + $0xa80] sm:$0xff]
        %v475 = vld [vmem:[%s117 + $0xa88] sm:$0xff]
        %v476 = vld [vmem:[%s117 + $0xa90] sm:$0xff]
        %v477 = vld [vmem:[%s117 + $0xa98] sm:$0xff]
        %v478 = vld [vmem:[%s117 + $0xaa0] sm:$0xff]
        %v479 = vld [vmem:[%s117 + $0xaa8] sm:$0xff]
        %v480 = vld [vmem:[%s117 + $0xab0] sm:$0xff]
        %v481 = vld [vmem:[%s117 + $0xab8] sm:$0xff]
        %v482 = vld [vmem:[%s117 + $0xac0] sm:$0xff]
        %v483 = vld [vmem:[%s117 + $0xac8] sm:$0xff]
        %v484 = vld [vmem:[%s117 + $0xad0] sm:$0xff]
        %v485 = vld [vmem:[%s117 + $0xad8] sm:$0xff]
        %v486 = vld [vmem:[%s117 + $0xae0] sm:$0xff]
        %v487 = vld [vmem:[%s117 + $0xae8] sm:$0xff]
        %v488 = vld [vmem:[%s117 + $0xaf0] sm:$0xff]
        %v489 = vld [vmem:[%s117 + $0xaf8] sm:$0xff]
        %v490 = vld [vmem:[%s117 + $0xb00] sm:$0xff]
        %v491 = vld [vmem:[%s117 + $0xb08] sm:$0xff]
        %v492 = vld [vmem:[%s117 + $0xb10] sm:$0xff]
        %v493 = vld [vmem:[%s117 + $0xb18] sm:$0xff]
        %v494 = vld [vmem:[%s117 + $0xb20] sm:$0xff]
        %v495 = vld [vmem:[%s117 + $0xb28] sm:$0xff]
        %v496 = vld [vmem:[%s117 + $0xb30] sm:$0xff]
        %v497 = vld [vmem:[%s117 + $0xb38] sm:$0xff]
        %v498 = vld [vmem:[%s117 + $0xb40] sm:$0xff]
        %v499 = vld [vmem:[%s117 + $0xb48] sm:$0xff]
        %v500 = vld [vmem:[%s117 + $0xb50] sm:$0xff]
        %v501 = vld [vmem:[%s117 + $0xb58] sm:$0xff]
        %v502 = vld [vmem:[%s117 + $0xb60] sm:$0xff]
        %v503 = vld [vmem:[%s117 + $0xb68] sm:$0xff]
        %v504 = vld [vmem:[%s117 + $0xb70] sm:$0xff]
        %v505 = vld [vmem:[%s117 + $0xb78] sm:$0xff]
        %v506 = vld [vmem:[%s117 + $0xb80] sm:$0xff]
        %v507 = vld [vmem:[%s117 + $0xb88] sm:$0xff]
        %v508 = vld [vmem:[%s117 + $0xb90] sm:$0xff]
        %v509 = vld [vmem:[%s117 + $0xb98] sm:$0xff]
        %v510 = vld [vmem:[%s117 + $0xba0] sm:$0xff]
        %v511 = vld [vmem:[%s117 + $0xba8] sm:$0xff]
        %v512 = vld [vmem:[%s117 + $0xbb0] sm:$0xff]
        %v513 = vld [vmem:[%s117 + $0xbb8] sm:$0xff]
        %v514 = vld [vmem:[%s117 + $0xbc0] sm:$0xff]
        %v515 = vld [vmem:[%s117 + $0xbc8] sm:$0xff]
        %v516 = vld [vmem:[%s117 + $0xbd0] sm:$0xff]
        %v517 = vld [vmem:[%s117 + $0xbd8] sm:$0xff]
        %v518 = vld [vmem:[%s117 + $0xbe0] sm:$0xff]
        %v519 = vld [vmem:[%s117 + $0xbe8] sm:$0xff]
        %v520 = vld [vmem:[%s117 + $0xbf0] sm:$0xff]
        %v521 = vld [vmem:[%s117 + $0xbf8] sm:$0xff]
        %v522 = vld [vmem:[%s117 + $0xc00] sm:$0xff]
        %v523 = vld [vmem:[%s117 + $0xc08] sm:$0xff]
        %v524 = vld [vmem:[%s117 + $0xc10] sm:$0xff]
        %v525 = vld [vmem:[%s117 + $0xc18] sm:$0xff]
        %v526 = vld [vmem:[%s117 + $0xc20] sm:$0xff]
        %v527 = vld [vmem:[%s117 + $0xc28] sm:$0xff]
        %v528 = vld [vmem:[%s117 + $0xc30] sm:$0xff]
        %v529 = vld [vmem:[%s117 + $0xc38] sm:$0xff]
        %v530 = vld [vmem:[%s117 + $0xc40] sm:$0xff]
        %v531 = vld [vmem:[%s117 + $0xc48] sm:$0xff]
        %v532 = vld [vmem:[%s117 + $0xc50] sm:$0xff]
        %v533 = vld [vmem:[%s117 + $0xc58] sm:$0xff]
        %v534 = vld [vmem:[%s117 + $0xc60] sm:$0xff]
        %v535 = vld [vmem:[%s117 + $0xc68] sm:$0xff]
        %v536 = vld [vmem:[%s117 + $0xc70] sm:$0xff]
        %v537 = vld [vmem:[%s117 + $0xc78] sm:$0xff]
        %v538 = vld [vmem:[%s117 + $0xc80] sm:$0xff]
        %v539 = vld [vmem:[%s117 + $0xc88] sm:$0xff]
        %v540 = vld [vmem:[%s117 + $0xc90] sm:$0xff]
        %v541 = vld [vmem:[%s117 + $0xc98] sm:$0xff]
        %v542 = vld [vmem:[%s117 + $0xca0] sm:$0xff]
        %v543 = vld [vmem:[%s117 + $0xca8] sm:$0xff]
        %v544 = vld [vmem:[%s117 + $0xcb0] sm:$0xff]
        %v545 = vld [vmem:[%s117 + $0xcb8] sm:$0xff]
        %v546 = vld [vmem:[%s117 + $0xcc0] sm:$0xff]
        %v547 = vld [vmem:[%s117 + $0xcc8] sm:$0xff]
        %v548 = vld [vmem:[%s117 + $0xcd0] sm:$0xff]
        %v549 = vld [vmem:[%s117 + $0xcd8] sm:$0xff]
        %v550 = vld [vmem:[%s117 + $0xce0] sm:$0xff]
        %v551 = vld [vmem:[%s117 + $0xce8] sm:$0xff]
        %v552 = vld [vmem:[%s117 + $0xcf0] sm:$0xff]
        %v553 = vld [vmem:[%s117 + $0xcf8] sm:$0xff]
        %v554 = vld [vmem:[%s117 + $0xd00] sm:$0xff]
        %v555 = vld [vmem:[%s117 + $0xd08] sm:$0xff]
        %v556 = vld [vmem:[%s117 + $0xd10] sm:$0xff]
        %v557 = vld [vmem:[%s117 + $0xd18] sm:$0xff]
        %v558 = vld [vmem:[%s117 + $0xd20] sm:$0xff]
        %v559 = vld [vmem:[%s117 + $0xd28] sm:$0xff]
        %v560 = vld [vmem:[%s117 + $0xd30] sm:$0xff]
        %v561 = vld [vmem:[%s117 + $0xd38] sm:$0xff]
        %v562 = vld [vmem:[%s117 + $0xd40] sm:$0xff]
        %v563 = vld [vmem:[%s117 + $0xd48] sm:$0xff]
        %v564 = vld [vmem:[%s117 + $0xd50] sm:$0xff]
        %v565 = vld [vmem:[%s117 + $0xd58] sm:$0xff]
        %v566 = vld [vmem:[%s117 + $0xd60] sm:$0xff]
        %v567 = vld [vmem:[%s117 + $0xd68] sm:$0xff]
        %v568 = vld [vmem:[%s117 + $0xd70] sm:$0xff]
        %v569 = vld [vmem:[%s117 + $0xd78] sm:$0xff]
        %v570 = vld [vmem:[%s117 + $0xd80] sm:$0xff]
        %v571 = vld [vmem:[%s117 + $0xd88] sm:$0xff]
        %v572 = vld [vmem:[%s117 + $0xd90] sm:$0xff]
        %v573 = vld [vmem:[%s117 + $0xd98] sm:$0xff]
        %v574 = vld [vmem:[%s117 + $0xda0] sm:$0xff]
        %v575 = vld [vmem:[%s117 + $0xda8] sm:$0xff]
        %v576 = vld [vmem:[%s117 + $0xdb0] sm:$0xff]
        %v577 = vld [vmem:[%s117 + $0xdb8] sm:$0xff]
        %v578 = vld [vmem:[%s117 + $0xdc0] sm:$0xff]
        %v579 = vld [vmem:[%s117 + $0xdc8] sm:$0xff]
        %v580 = vld [vmem:[%s117 + $0xdd0] sm:$0xff]
        %v581 = vld [vmem:[%s117 + $0xdd8] sm:$0xff]
        %v582 = vld [vmem:[%s117 + $0xde0] sm:$0xff]
        %v583 = vld [vmem:[%s117 + $0xde8] sm:$0xff]
        %v584 = vld [vmem:[%s117 + $0xdf0] sm:$0xff]
        %v585 = vld [vmem:[%s117 + $0xdf8] sm:$0xff]
        %v586 = vld [vmem:[%s117 + $0xe00] sm:$0xff]
        %v587 = vld [vmem:[%s117 + $0xe08] sm:$0xff]
        %v588 = vld [vmem:[%s117 + $0xe10] sm:$0xff]
        %v589 = vld [vmem:[%s117 + $0xe18] sm:$0xff]
        %v590 = vld [vmem:[%s117 + $0xe20] sm:$0xff]
        %v591 = vld [vmem:[%s117 + $0xe28] sm:$0xff]
        %v592 = vld [vmem:[%s117 + $0xe30] sm:$0xff]
        %v593 = vld [vmem:[%s117 + $0xe38] sm:$0xff]
        %v594 = vld [vmem:[%s117 + $0xe40] sm:$0xff]
        %v595 = vld [vmem:[%s117 + $0xe48] sm:$0xff]
        %v596 = vld [vmem:[%s117 + $0xe50] sm:$0xff]
        %v597 = vld [vmem:[%s117 + $0xe58] sm:$0xff]
        %v598 = vld [vmem:[%s117 + $0xe60] sm:$0xff]
        %v599 = vld [vmem:[%s117 + $0xe68] sm:$0xff]
        %v600 = vld [vmem:[%s117 + $0xe70] sm:$0xff]
        %v601 = vld [vmem:[%s117 + $0xe78] sm:$0xff]
        %v602 = vld [vmem:[%s117 + $0xe80] sm:$0xff]
        %v603 = vld [vmem:[%s117 + $0xe88] sm:$0xff]
        %v604 = vld [vmem:[%s117 + $0xe90] sm:$0xff]
        %v605 = vld [vmem:[%s117 + $0xe98] sm:$0xff]
        %v606 = vld [vmem:[%s117 + $0xea0] sm:$0xff]
        %v607 = vld [vmem:[%s117 + $0xea8] sm:$0xff]
        %v608 = vld [vmem:[%s117 + $0xeb0] sm:$0xff]
        %v609 = vld [vmem:[%s117 + $0xeb8] sm:$0xff]
        %v610 = vld [vmem:[%s117 + $0xec0] sm:$0xff]
        %v611 = vld [vmem:[%s117 + $0xec8] sm:$0xff]
        %v612 = vld [vmem:[%s117 + $0xed0] sm:$0xff]
        %v613 = vld [vmem:[%s117 + $0xed8] sm:$0xff]
        %v614 = vld [vmem:[%s117 + $0xee0] sm:$0xff]
        %v615 = vld [vmem:[%s117 + $0xee8] sm:$0xff]
        %v616 = vld [vmem:[%s117 + $0xef0] sm:$0xff]
        %v617 = vld [vmem:[%s117 + $0xef8] sm:$0xff]
        %v618 = vld [vmem:[%s117 + $0xf00] sm:$0xff]
        %v619 = vld [vmem:[%s117 + $0xf08] sm:$0xff]
        %v620 = vld [vmem:[%s117 + $0xf10] sm:$0xff]
        %v621 = vld [vmem:[%s117 + $0xf18] sm:$0xff]
        %v622 = vld [vmem:[%s117 + $0xf20] sm:$0xff]
        %v623 = vld [vmem:[%s117 + $0xf28] sm:$0xff]
        %v624 = vld [vmem:[%s117 + $0xf30] sm:$0xff]
        %v625 = vld [vmem:[%s117 + $0xf38] sm:$0xff]
        %v626 = vld [vmem:[%s117 + $0xf40] sm:$0xff]
        %v627 = vld [vmem:[%s117 + $0xf48] sm:$0xff]
        %v628 = vld [vmem:[%s117 + $0xf50] sm:$0xff]
        %v629 = vld [vmem:[%s117 + $0xf58] sm:$0xff]
        %v630 = vld [vmem:[%s117 + $0xf60] sm:$0xff]
        %v631 = vld [vmem:[%s117 + $0xf68] sm:$0xff]
        %v632 = vld [vmem:[%s117 + $0xf70] sm:$0xff]
        %v633 = vld [vmem:[%s117 + $0xf78] sm:$0xff]
        %v634 = vld [vmem:[%s117 + $0xf80] sm:$0xff]
        %v635 = vld [vmem:[%s117 + $0xf88] sm:$0xff]
        %v636 = vld [vmem:[%s117 + $0xf90] sm:$0xff]
        %v637 = vld [vmem:[%s117 + $0xf98] sm:$0xff]
        %v638 = vld [vmem:[%s117 + $0xfa0] sm:$0xff]
        %v639 = vld [vmem:[%s117 + $0xfa8] sm:$0xff]
        %v640 = vld [vmem:[%s117 + $0xfb0] sm:$0xff]
        %v641 = vld [vmem:[%s117 + $0xfb8] sm:$0xff]
        %v642 = vld [vmem:[%s117 + $0xfc0] sm:$0xff]
        %v643 = vld [vmem:[%s117 + $0xfc8] sm:$0xff]
        %v644 = vld [vmem:[%s117 + $0xfd0] sm:$0xff]
        %v645 = vld [vmem:[%s117 + $0xfd8] sm:$0xff]
        %v646 = vld [vmem:[%s117 + $0xfe0] sm:$0xff]
        %v647 = vld [vmem:[%s117 + $0xfe8] sm:$0xff]
        %v648 = vld [vmem:[%s117 + $0xff0] sm:$0xff]
        %v649 = vld [vmem:[%s117 + $0xff8] sm:$0xff]
        %v650 = vmax.f32 %v138, 0.0
        %v651 = vmax.f32 %v139, 0.0
        %v652 = vmax.f32 %v140, 0.0
        %v653 = vmax.f32 %v141, 0.0
        %v654 = vmax.f32 %v142, 0.0
        %v655 = vmax.f32 %v143, 0.0
        %v656 = vmax.f32 %v144, 0.0
        %v657 = vmax.f32 %v145, 0.0
        %v658 = vmax.f32 %v146, 0.0
        %v659 = vmax.f32 %v147, 0.0
        %v660 = vmax.f32 %v148, 0.0
        %v661 = vmax.f32 %v149, 0.0
        %v662 = vmax.f32 %v150, 0.0
        %v663 = vmax.f32 %v151, 0.0
        %v664 = vmax.f32 %v152, 0.0
        %v665 = vmax.f32 %v153, 0.0
        %v666 = vmax.f32 %v154, 0.0
        %v667 = vmax.f32 %v155, 0.0
        %v668 = vmax.f32 %v156, 0.0
        %v669 = vmax.f32 %v157, 0.0
        %v670 = vmax.f32 %v158, 0.0
        %v671 = vmax.f32 %v159, 0.0
        %v672 = vmax.f32 %v160, 0.0
        %v673 = vmax.f32 %v161, 0.0
        %v674 = vmax.f32 %v162, 0.0
        %v675 = vmax.f32 %v163, 0.0
        %v676 = vmax.f32 %v164, 0.0
        %v677 = vmax.f32 %v165, 0.0
        %v678 = vmax.f32 %v166, 0.0
        %v679 = vmax.f32 %v167, 0.0
        %v680 = vmax.f32 %v168, 0.0
        %v681 = vmax.f32 %v169, 0.0
        %v682 = vmax.f32 %v170, 0.0
        %v683 = vmax.f32 %v171, 0.0
        %v684 = vmax.f32 %v172, 0.0
        %v685 = vmax.f32 %v173, 0.0
        %v686 = vmax.f32 %v174, 0.0
        %v687 = vmax.f32 %v175, 0.0
        %v688 = vmax.f32 %v176, 0.0
        %v689 = vmax.f32 %v177, 0.0
        %v690 = vmax.f32 %v178, 0.0
        %v691 = vmax.f32 %v179, 0.0
        %v692 = vmax.f32 %v180, 0.0
        %v693 = vmax.f32 %v181, 0.0
        %v694 = vmax.f32 %v182, 0.0
        %v695 = vmax.f32 %v183, 0.0
        %v696 = vmax.f32 %v184, 0.0
        %v697 = vmax.f32 %v185, 0.0
        %v698 = vmax.f32 %v186, 0.0
        %v699 = vmax.f32 %v187, 0.0
        %v700 = vmax.f32 %v188, 0.0
        %v701 = vmax.f32 %v189, 0.0
        %v702 = vmax.f32 %v190, 0.0
        %v703 = vmax.f32 %v191, 0.0
        %v704 = vmax.f32 %v192, 0.0
        %v705 = vmax.f32 %v193, 0.0
        %v706 = vmax.f32 %v194, 0.0
        %v707 = vmax.f32 %v195, 0.0
        %v708 = vmax.f32 %v196, 0.0
        %v709 = vmax.f32 %v197, 0.0
        %v710 = vmax.f32 %v198, 0.0
        %v711 = vmax.f32 %v199, 0.0
        %v712 = vmax.f32 %v200, 0.0
        %v713 = vmax.f32 %v201, 0.0
        %v714 = vmax.f32 %v202, 0.0
        %v715 = vmax.f32 %v203, 0.0
        %v716 = vmax.f32 %v204, 0.0
        %v717 = vmax.f32 %v205, 0.0
        %v718 = vmax.f32 %v206, 0.0
        %v719 = vmax.f32 %v207, 0.0
        %v720 = vmax.f32 %v208, 0.0
        %v721 = vmax.f32 %v209, 0.0
        %v722 = vmax.f32 %v210, 0.0
        %v723 = vmax.f32 %v211, 0.0
        %v724 = vmax.f32 %v212, 0.0
        %v725 = vmax.f32 %v213, 0.0
        %v726 = vmax.f32 %v214, 0.0
        %v727 = vmax.f32 %v215, 0.0
        %v728 = vmax.f32 %v216, 0.0
        %v729 = vmax.f32 %v217, 0.0
        %v730 = vmax.f32 %v218, 0.0
        %v731 = vmax.f32 %v219, 0.0
        %v732 = vmax.f32 %v220, 0.0
        %v733 = vmax.f32 %v221, 0.0
        %v734 = vmax.f32 %v222, 0.0
        %v735 = vmax.f32 %v223, 0.0
        %v736 = vmax.f32 %v224, 0.0
        %v737 = vmax.f32 %v225, 0.0
        %v738 = vmax.f32 %v226, 0.0
        %v739 = vmax.f32 %v227, 0.0
        %v740 = vmax.f32 %v228, 0.0
        %v741 = vmax.f32 %v229, 0.0
        %v742 = vmax.f32 %v230, 0.0
        %v743 = vmax.f32 %v231, 0.0
        %v744 = vmax.f32 %v232, 0.0
        %v745 = vmax.f32 %v233, 0.0
        %v746 = vmax.f32 %v234, 0.0
        %v747 = vmax.f32 %v235, 0.0
        %v748 = vmax.f32 %v236, 0.0
        %v749 = vmax.f32 %v237, 0.0
        %v750 = vmax.f32 %v238, 0.0
        %v751 = vmax.f32 %v239, 0.0
        %v752 = vmax.f32 %v240, 0.0
        %v753 = vmax.f32 %v241, 0.0
        %v754 = vmax.f32 %v242, 0.0
        %v755 = vmax.f32 %v243, 0.0
        %v756 = vmax.f32 %v244, 0.0
        %v757 = vmax.f32 %v245, 0.0
        %v758 = vmax.f32 %v246, 0.0
        %v759 = vmax.f32 %v247, 0.0
        %v760 = vmax.f32 %v248, 0.0
        %v761 = vmax.f32 %v249, 0.0
        %v762 = vmax.f32 %v250, 0.0
        %v763 = vmax.f32 %v251, 0.0
        %v764 = vmax.f32 %v252, 0.0
        %v765 = vmax.f32 %v253, 0.0
        %v766 = vmax.f32 %v254, 0.0
        %v767 = vmax.f32 %v255, 0.0
        %v768 = vmax.f32 %v256, 0.0
        %v769 = vmax.f32 %v257, 0.0
        %v770 = vmax.f32 %v258, 0.0
        %v771 = vmax.f32 %v259, 0.0
        %v772 = vmax.f32 %v260, 0.0
        %v773 = vmax.f32 %v261, 0.0
        %v774 = vmax.f32 %v262, 0.0
        %v775 = vmax.f32 %v263, 0.0
        %v776 = vmax.f32 %v264, 0.0
        %v777 = vmax.f32 %v265, 0.0
        %v778 = vmax.f32 %v266, 0.0
        %v779 = vmax.f32 %v267, 0.0
        %v780 = vmax.f32 %v268, 0.0
        %v781 = vmax.f32 %v269, 0.0
        %v782 = vmax.f32 %v270, 0.0
        %v783 = vmax.f32 %v271, 0.0
        %v784 = vmax.f32 %v272, 0.0
        %v785 = vmax.f32 %v273, 0.0
        %v786 = vmax.f32 %v274, 0.0
        %v787 = vmax.f32 %v275, 0.0
        %v788 = vmax.f32 %v276, 0.0
        %v789 = vmax.f32 %v277, 0.0
        %v790 = vmax.f32 %v278, 0.0
        %v791 = vmax.f32 %v279, 0.0
        %v792 = vmax.f32 %v280, 0.0
        %v793 = vmax.f32 %v281, 0.0
        %v794 = vmax.f32 %v282, 0.0
        %v795 = vmax.f32 %v283, 0.0
        %v796 = vmax.f32 %v284, 0.0
        %v797 = vmax.f32 %v285, 0.0
        %v798 = vmax.f32 %v286, 0.0
        %v799 = vmax.f32 %v287, 0.0
        %v800 = vmax.f32 %v288, 0.0
        %v801 = vmax.f32 %v289, 0.0
        %v802 = vmax.f32 %v290, 0.0
        %v803 = vmax.f32 %v291, 0.0
        %v804 = vmax.f32 %v292, 0.0
        %v805 = vmax.f32 %v293, 0.0
        %v806 = vmax.f32 %v294, 0.0
        %v807 = vmax.f32 %v295, 0.0
        %v808 = vmax.f32 %v296, 0.0
        %v809 = vmax.f32 %v297, 0.0
        %v810 = vmax.f32 %v298, 0.0
        %v811 = vmax.f32 %v299, 0.0
        %v812 = vmax.f32 %v300, 0.0
        %v813 = vmax.f32 %v301, 0.0
        %v814 = vmax.f32 %v302, 0.0
        %v815 = vmax.f32 %v303, 0.0
        %v816 = vmax.f32 %v304, 0.0
        %v817 = vmax.f32 %v305, 0.0
        %v818 = vmax.f32 %v306, 0.0
        %v819 = vmax.f32 %v307, 0.0
        %v820 = vmax.f32 %v308, 0.0
        %v821 = vmax.f32 %v309, 0.0
        %v822 = vmax.f32 %v310, 0.0
        %v823 = vmax.f32 %v311, 0.0
        %v824 = vmax.f32 %v312, 0.0
        %v825 = vmax.f32 %v313, 0.0
        %v826 = vmax.f32 %v314, 0.0
        %v827 = vmax.f32 %v315, 0.0
        %v828 = vmax.f32 %v316, 0.0
        %v829 = vmax.f32 %v317, 0.0
        %v830 = vmax.f32 %v318, 0.0
        %v831 = vmax.f32 %v319, 0.0
        %v832 = vmax.f32 %v320, 0.0
        %v833 = vmax.f32 %v321, 0.0
        %v834 = vmax.f32 %v322, 0.0
        %v835 = vmax.f32 %v323, 0.0
        %v836 = vmax.f32 %v324, 0.0
        %v837 = vmax.f32 %v325, 0.0
        %v838 = vmax.f32 %v326, 0.0
        %v839 = vmax.f32 %v327, 0.0
        %v840 = vmax.f32 %v328, 0.0
        %v841 = vmax.f32 %v329, 0.0
        %v842 = vmax.f32 %v330, 0.0
        %v843 = vmax.f32 %v331, 0.0
        %v844 = vmax.f32 %v332, 0.0
        %v845 = vmax.f32 %v333, 0.0
        %v846 = vmax.f32 %v334, 0.0
        %v847 = vmax.f32 %v335, 0.0
        %v848 = vmax.f32 %v336, 0.0
        %v849 = vmax.f32 %v337, 0.0
        %v850 = vmax.f32 %v338, 0.0
        %v851 = vmax.f32 %v339, 0.0
        %v852 = vmax.f32 %v340, 0.0
        %v853 = vmax.f32 %v341, 0.0
        %v854 = vmax.f32 %v342, 0.0
        %v855 = vmax.f32 %v343, 0.0
        %v856 = vmax.f32 %v344, 0.0
        %v857 = vmax.f32 %v345, 0.0
        %v858 = vmax.f32 %v346, 0.0
        %v859 = vmax.f32 %v347, 0.0
        %v860 = vmax.f32 %v348, 0.0
        %v861 = vmax.f32 %v349, 0.0
        %v862 = vmax.f32 %v350, 0.0
        %v863 = vmax.f32 %v351, 0.0
        %v864 = vmax.f32 %v352, 0.0
        %v865 = vmax.f32 %v353, 0.0
        %v866 = vmax.f32 %v354, 0.0
        %v867 = vmax.f32 %v355, 0.0
        %v868 = vmax.f32 %v356, 0.0
        %v869 = vmax.f32 %v357, 0.0
        %v870 = vmax.f32 %v358, 0.0
        %v871 = vmax.f32 %v359, 0.0
        %v872 = vmax.f32 %v360, 0.0
        %v873 = vmax.f32 %v361, 0.0
        %v874 = vmax.f32 %v362, 0.0
        %v875 = vmax.f32 %v363, 0.0
        %v876 = vmax.f32 %v364, 0.0
        %v877 = vmax.f32 %v365, 0.0
        %v878 = vmax.f32 %v366, 0.0
        %v879 = vmax.f32 %v367, 0.0
        %v880 = vmax.f32 %v368, 0.0
        %v881 = vmax.f32 %v369, 0.0
        %v882 = vmax.f32 %v370, 0.0
        %v883 = vmax.f32 %v371, 0.0
        %v884 = vmax.f32 %v372, 0.0
        %v885 = vmax.f32 %v373, 0.0
        %v886 = vmax.f32 %v374, 0.0
        %v887 = vmax.f32 %v375, 0.0
        %v888 = vmax.f32 %v376, 0.0
        %v889 = vmax.f32 %v377, 0.0
        %v890 = vmax.f32 %v378, 0.0
        %v891 = vmax.f32 %v379, 0.0
        %v892 = vmax.f32 %v380, 0.0
        %v893 = vmax.f32 %v381, 0.0
        %v894 = vmax.f32 %v382, 0.0
        %v895 = vmax.f32 %v383, 0.0
        %v896 = vmax.f32 %v384, 0.0
        %v897 = vmax.f32 %v385, 0.0
        %v898 = vmax.f32 %v386, 0.0
        %v899 = vmax.f32 %v387, 0.0
        %v900 = vmax.f32 %v388, 0.0
        %v901 = vmax.f32 %v389, 0.0
        %v902 = vmax.f32 %v390, 0.0
        %v903 = vmax.f32 %v391, 0.0
        %v904 = vmax.f32 %v392, 0.0
        %v905 = vmax.f32 %v393, 0.0
        %v906 = vmax.f32 %v394, 0.0
        %v907 = vmax.f32 %v395, 0.0
        %v908 = vmax.f32 %v396, 0.0
        %v909 = vmax.f32 %v397, 0.0
        %v910 = vmax.f32 %v398, 0.0
        %v911 = vmax.f32 %v399, 0.0
        %v912 = vmax.f32 %v400, 0.0
        %v913 = vmax.f32 %v401, 0.0
        %v914 = vmax.f32 %v402, 0.0
        %v915 = vmax.f32 %v403, 0.0
        %v916 = vmax.f32 %v404, 0.0
        %v917 = vmax.f32 %v405, 0.0
        %v918 = vmax.f32 %v406, 0.0
        %v919 = vmax.f32 %v407, 0.0
        %v920 = vmax.f32 %v408, 0.0
        %v921 = vmax.f32 %v409, 0.0
        %v922 = vmax.f32 %v410, 0.0
        %v923 = vmax.f32 %v411, 0.0
        %v924 = vmax.f32 %v412, 0.0
        %v925 = vmax.f32 %v413, 0.0
        %v926 = vmax.f32 %v414, 0.0
        %v927 = vmax.f32 %v415, 0.0
        %v928 = vmax.f32 %v416, 0.0
        %v929 = vmax.f32 %v417, 0.0
        %v930 = vmax.f32 %v418, 0.0
        %v931 = vmax.f32 %v419, 0.0
        %v932 = vmax.f32 %v420, 0.0
        %v933 = vmax.f32 %v421, 0.0
        %v934 = vmax.f32 %v422, 0.0
        %v935 = vmax.f32 %v423, 0.0
        %v936 = vmax.f32 %v424, 0.0
        %v937 = vmax.f32 %v425, 0.0
        %v938 = vmax.f32 %v426, 0.0
        %v939 = vmax.f32 %v427, 0.0
        %v940 = vmax.f32 %v428, 0.0
        %v941 = vmax.f32 %v429, 0.0
        %v942 = vmax.f32 %v430, 0.0
        %v943 = vmax.f32 %v431, 0.0
        %v944 = vmax.f32 %v432, 0.0
        %v945 = vmax.f32 %v433, 0.0
        %v946 = vmax.f32 %v434, 0.0
        %v947 = vmax.f32 %v435, 0.0
        %v948 = vmax.f32 %v436, 0.0
        %v949 = vmax.f32 %v437, 0.0
        %v950 = vmax.f32 %v438, 0.0
        %v951 = vmax.f32 %v439, 0.0
        %v952 = vmax.f32 %v440, 0.0
        %v953 = vmax.f32 %v441, 0.0
        %v954 = vmax.f32 %v442, 0.0
        %v955 = vmax.f32 %v443, 0.0
        %v956 = vmax.f32 %v444, 0.0
        %v957 = vmax.f32 %v445, 0.0
        %v958 = vmax.f32 %v446, 0.0
        %v959 = vmax.f32 %v447, 0.0
        %v960 = vmax.f32 %v448, 0.0
        %v961 = vmax.f32 %v449, 0.0
        %v962 = vmax.f32 %v450, 0.0
        %v963 = vmax.f32 %v451, 0.0
        %v964 = vmax.f32 %v452, 0.0
        %v965 = vmax.f32 %v453, 0.0
        %v966 = vmax.f32 %v454, 0.0
        %v967 = vmax.f32 %v455, 0.0
        %v968 = vmax.f32 %v456, 0.0
        %v969 = vmax.f32 %v457, 0.0
        %v970 = vmax.f32 %v458, 0.0
        %v971 = vmax.f32 %v459, 0.0
        %v972 = vmax.f32 %v460, 0.0
        %v973 = vmax.f32 %v461, 0.0
        %v974 = vmax.f32 %v462, 0.0
        %v975 = vmax.f32 %v463, 0.0
        %v976 = vmax.f32 %v464, 0.0
        %v977 = vmax.f32 %v465, 0.0
        %v978 = vmax.f32 %v466, 0.0
        %v979 = vmax.f32 %v467, 0.0
        %v980 = vmax.f32 %v468, 0.0
        %v981 = vmax.f32 %v469, 0.0
        %v982 = vmax.f32 %v470, 0.0
        %v983 = vmax.f32 %v471, 0.0
        %v984 = vmax.f32 %v472, 0.0
        %v985 = vmax.f32 %v473, 0.0
        %v986 = vmax.f32 %v474, 0.0
        %v987 = vmax.f32 %v475, 0.0
        %v988 = vmax.f32 %v476, 0.0
        %v989 = vmax.f32 %v477, 0.0
        %v990 = vmax.f32 %v478, 0.0
        %v991 = vmax.f32 %v479, 0.0
        %v992 = vmax.f32 %v480, 0.0
        %v993 = vmax.f32 %v481, 0.0
        %v994 = vmax.f32 %v482, 0.0
        %v995 = vmax.f32 %v483, 0.0
        %v996 = vmax.f32 %v484, 0.0
        %v997 = vmax.f32 %v485, 0.0
        %v998 = vmax.f32 %v486, 0.0
        %v999 = vmax.f32 %v487, 0.0
        %v1000 = vmax.f32 %v488, 0.0
        %v1001 = vmax.f32 %v489, 0.0
        %v1002 = vmax.f32 %v490, 0.0
        %v1003 = vmax.f32 %v491, 0.0
        %v1004 = vmax.f32 %v492, 0.0
        %v1005 = vmax.f32 %v493, 0.0
        %v1006 = vmax.f32 %v494, 0.0
        %v1007 = vmax.f32 %v495, 0.0
        %v1008 = vmax.f32 %v496, 0.0
        %v1009 = vmax.f32 %v497, 0.0
        %v1010 = vmax.f32 %v498, 0.0
        %v1011 = vmax.f32 %v499, 0.0
        %v1012 = vmax.f32 %v500, 0.0
        %v1013 = vmax.f32 %v501, 0.0
        %v1014 = vmax.f32 %v502, 0.0
        %v1015 = vmax.f32 %v503, 0.0
        %v1016 = vmax.f32 %v504, 0.0
        %v1017 = vmax.f32 %v505, 0.0
        %v1018 = vmax.f32 %v506, 0.0
        %v1019 = vmax.f32 %v507, 0.0
        %v1020 = vmax.f32 %v508, 0.0
        %v1021 = vmax.f32 %v509, 0.0
        %v1022 = vmax.f32 %v510, 0.0
        %v1023 = vmax.f32 %v511, 0.0
        %v1024 = vmax.f32 %v512, 0.0
        %v1025 = vmax.f32 %v513, 0.0
        %v1026 = vmax.f32 %v514, 0.0
        %v1027 = vmax.f32 %v515, 0.0
        %v1028 = vmax.f32 %v516, 0.0
        %v1029 = vmax.f32 %v517, 0.0
        %v1030 = vmax.f32 %v518, 0.0
        %v1031 = vmax.f32 %v519, 0.0
        %v1032 = vmax.f32 %v520, 0.0
        %v1033 = vmax.f32 %v521, 0.0
        %v1034 = vmax.f32 %v522, 0.0
        %v1035 = vmax.f32 %v523, 0.0
        %v1036 = vmax.f32 %v524, 0.0
        %v1037 = vmax.f32 %v525, 0.0
        %v1038 = vmax.f32 %v526, 0.0
        %v1039 = vmax.f32 %v527, 0.0
        %v1040 = vmax.f32 %v528, 0.0
        %v1041 = vmax.f32 %v529, 0.0
        %v1042 = vmax.f32 %v530, 0.0
        %v1043 = vmax.f32 %v531, 0.0
        %v1044 = vmax.f32 %v532, 0.0
        %v1045 = vmax.f32 %v533, 0.0
        %v1046 = vmax.f32 %v534, 0.0
        %v1047 = vmax.f32 %v535, 0.0
        %v1048 = vmax.f32 %v536, 0.0
        %v1049 = vmax.f32 %v537, 0.0
        %v1050 = vmax.f32 %v538, 0.0
        %v1051 = vmax.f32 %v539, 0.0
        %v1052 = vmax.f32 %v540, 0.0
        %v1053 = vmax.f32 %v541, 0.0
        %v1054 = vmax.f32 %v542, 0.0
        %v1055 = vmax.f32 %v543, 0.0
        %v1056 = vmax.f32 %v544, 0.0
        %v1057 = vmax.f32 %v545, 0.0
        %v1058 = vmax.f32 %v546, 0.0
        %v1059 = vmax.f32 %v547, 0.0
        %v1060 = vmax.f32 %v548, 0.0
        %v1061 = vmax.f32 %v549, 0.0
        %v1062 = vmax.f32 %v550, 0.0
        %v1063 = vmax.f32 %v551, 0.0
        %v1064 = vmax.f32 %v552, 0.0
        %v1065 = vmax.f32 %v553, 0.0
        %v1066 = vmax.f32 %v554, 0.0
        %v1067 = vmax.f32 %v555, 0.0
        %v1068 = vmax.f32 %v556, 0.0
        %v1069 = vmax.f32 %v557, 0.0
        %v1070 = vmax.f32 %v558, 0.0
        %v1071 = vmax.f32 %v559, 0.0
        %v1072 = vmax.f32 %v560, 0.0
        %v1073 = vmax.f32 %v561, 0.0
        %v1074 = vmax.f32 %v562, 0.0
        %v1075 = vmax.f32 %v563, 0.0
        %v1076 = vmax.f32 %v564, 0.0
        %v1077 = vmax.f32 %v565, 0.0
        %v1078 = vmax.f32 %v566, 0.0
        %v1079 = vmax.f32 %v567, 0.0
        %v1080 = vmax.f32 %v568, 0.0
        %v1081 = vmax.f32 %v569, 0.0
        %v1082 = vmax.f32 %v570, 0.0
        %v1083 = vmax.f32 %v571, 0.0
        %v1084 = vmax.f32 %v572, 0.0
        %v1085 = vmax.f32 %v573, 0.0
        %v1086 = vmax.f32 %v574, 0.0
        %v1087 = vmax.f32 %v575, 0.0
        %v1088 = vmax.f32 %v576, 0.0
        %v1089 = vmax.f32 %v577, 0.0
        %v1090 = vmax.f32 %v578, 0.0
        %v1091 = vmax.f32 %v579, 0.0
        %v1092 = vmax.f32 %v580, 0.0
        %v1093 = vmax.f32 %v581, 0.0
        %v1094 = vmax.f32 %v582, 0.0
        %v1095 = vmax.f32 %v583, 0.0
        %v1096 = vmax.f32 %v584, 0.0
        %v1097 = vmax.f32 %v585, 0.0
        %v1098 = vmax.f32 %v586, 0.0
        %v1099 = vmax.f32 %v587, 0.0
        %v1100 = vmax.f32 %v588, 0.0
        %v1101 = vmax.f32 %v589, 0.0
        %v1102 = vmax.f32 %v590, 0.0
        %v1103 = vmax.f32 %v591, 0.0
        %v1104 = vmax.f32 %v592, 0.0
        %v1105 = vmax.f32 %v593, 0.0
        %v1106 = vmax.f32 %v594, 0.0
        %v1107 = vmax.f32 %v595, 0.0
        %v1108 = vmax.f32 %v596, 0.0
        %v1109 = vmax.f32 %v597, 0.0
        %v1110 = vmax.f32 %v598, 0.0
        %v1111 = vmax.f32 %v599, 0.0
        %v1112 = vmax.f32 %v600, 0.0
        %v1113 = vmax.f32 %v601, 0.0
        %v1114 = vmax.f32 %v602, 0.0
        %v1115 = vmax.f32 %v603, 0.0
        %v1116 = vmax.f32 %v604, 0.0
        %v1117 = vmax.f32 %v605, 0.0
        %v1118 = vmax.f32 %v606, 0.0
        %v1119 = vmax.f32 %v607, 0.0
        %v1120 = vmax.f32 %v608, 0.0
        %v1121 = vmax.f32 %v609, 0.0
        %v1122 = vmax.f32 %v610, 0.0
        %v1123 = vmax.f32 %v611, 0.0
        %v1124 = vmax.f32 %v612, 0.0
        %v1125 = vmax.f32 %v613, 0.0
        %v1126 = vmax.f32 %v614, 0.0
        %v1127 = vmax.f32 %v615, 0.0
        %v1128 = vmax.f32 %v616, 0.0
        %v1129 = vmax.f32 %v617, 0.0
        %v1130 = vmax.f32 %v618, 0.0
        %v1131 = vmax.f32 %v619, 0.0
        %v1132 = vmax.f32 %v620, 0.0
        %v1133 = vmax.f32 %v621, 0.0
        %v1134 = vmax.f32 %v622, 0.0
        %v1135 = vmax.f32 %v623, 0.0
        %v1136 = vmax.f32 %v624, 0.0
        %v1137 = vmax.f32 %v625, 0.0
        %v1138 = vmax.f32 %v626, 0.0
        %v1139 = vmax.f32 %v627, 0.0
        %v1140 = vmax.f32 %v628, 0.0
        %v1141 = vmax.f32 %v629, 0.0
        %v1142 = vmax.f32 %v630, 0.0
        %v1143 = vmax.f32 %v631, 0.0
        %v1144 = vmax.f32 %v632, 0.0
        %v1145 = vmax.f32 %v633, 0.0
        %v1146 = vmax.f32 %v634, 0.0
        %v1147 = vmax.f32 %v635, 0.0
        %v1148 = vmax.f32 %v636, 0.0
        %v1149 = vmax.f32 %v637, 0.0
        %v1150 = vmax.f32 %v638, 0.0
        %v1151 = vmax.f32 %v639, 0.0
        %v1152 = vmax.f32 %v640, 0.0
        %v1153 = vmax.f32 %v641, 0.0
        %v1154 = vmax.f32 %v642, 0.0
        %v1155 = vmax.f32 %v643, 0.0
        %v1156 = vmax.f32 %v644, 0.0
        %v1157 = vmax.f32 %v645, 0.0
        %v1158 = vmax.f32 %v646, 0.0
        %v1159 = vmax.f32 %v647, 0.0
        %v1160 = vmax.f32 %v648, 0.0
        %v1161 = vmax.f32 %v649, 0.0
        %1162 = vst [vmem:[%s135] sm:$0xff] %v650
        %1163 = vst [vmem:[%s135 + $0x8] sm:$0xff] %v651
        %1164 = vst [vmem:[%s135 + $0x10] sm:$0xff] %v652
        %1165 = vst [vmem:[%s135 + $0x18] sm:$0xff] %v653
        %1166 = vst [vmem:[%s135 + $0x20] sm:$0xff] %v654
        %1167 = vst [vmem:[%s135 + $0x28] sm:$0xff] %v655
        %1168 = vst [vmem:[%s135 + $0x30] sm:$0xff] %v656
        %1169 = vst [vmem:[%s135 + $0x38] sm:$0xff] %v657
        %1170 = vst [vmem:[%s135 + $0x40] sm:$0xff] %v658
        %1171 = vst [vmem:[%s135 + $0x48] sm:$0xff] %v659
        %1172 = vst [vmem:[%s135 + $0x50] sm:$0xff] %v660
        %1173 = vst [vmem:[%s135 + $0x58] sm:$0xff] %v661
        %1174 = vst [vmem:[%s135 + $0x60] sm:$0xff] %v662
        %1175 = vst [vmem:[%s135 + $0x68] sm:$0xff] %v663
        %1176 = vst [vmem:[%s135 + $0x70] sm:$0xff] %v664
        %1177 = vst [vmem:[%s135 + $0x78] sm:$0xff] %v665
        %1178 = vst [vmem:[%s135 + $0x80] sm:$0xff] %v666
        %1179 = vst [vmem:[%s135 + $0x88] sm:$0xff] %v667
        %1180 = vst [vmem:[%s135 + $0x90] sm:$0xff] %v668
        %1181 = vst [vmem:[%s135 + $0x98] sm:$0xff] %v669
        %1182 = vst [vmem:[%s135 + $0xa0] sm:$0xff] %v670
        %1183 = vst [vmem:[%s135 + $0xa8] sm:$0xff] %v671
        %1184 = vst [vmem:[%s135 + $0xb0] sm:$0xff] %v672
        %1185 = vst [vmem:[%s135 + $0xb8] sm:$0xff] %v673
        %1186 = vst [vmem:[%s135 + $0xc0] sm:$0xff] %v674
        %1187 = vst [vmem:[%s135 + $0xc8] sm:$0xff] %v675
        %1188 = vst [vmem:[%s135 + $0xd0] sm:$0xff] %v676
        %1189 = vst [vmem:[%s135 + $0xd8] sm:$0xff] %v677
        %1190 = vst [vmem:[%s135 + $0xe0] sm:$0xff] %v678
        %1191 = vst [vmem:[%s135 + $0xe8] sm:$0xff] %v679
        %1192 = vst [vmem:[%s135 + $0xf0] sm:$0xff] %v680
        %1193 = vst [vmem:[%s135 + $0xf8] sm:$0xff] %v681
        %1194 = vst [vmem:[%s135 + $0x100] sm:$0xff] %v682
        %1195 = vst [vmem:[%s135 + $0x108] sm:$0xff] %v683
        %1196 = vst [vmem:[%s135 + $0x110] sm:$0xff] %v684
        %1197 = vst [vmem:[%s135 + $0x118] sm:$0xff] %v685
        %1198 = vst [vmem:[%s135 + $0x120] sm:$0xff] %v686
        %1199 = vst [vmem:[%s135 + $0x128] sm:$0xff] %v687
        %1200 = vst [vmem:[%s135 + $0x130] sm:$0xff] %v688
        %1201 = vst [vmem:[%s135 + $0x138] sm:$0xff] %v689
        %1202 = vst [vmem:[%s135 + $0x140] sm:$0xff] %v690
        %1203 = vst [vmem:[%s135 + $0x148] sm:$0xff] %v691
        %1204 = vst [vmem:[%s135 + $0x150] sm:$0xff] %v692
        %1205 = vst [vmem:[%s135 + $0x158] sm:$0xff] %v693
        %1206 = vst [vmem:[%s135 + $0x160] sm:$0xff] %v694
        %1207 = vst [vmem:[%s135 + $0x168] sm:$0xff] %v695
        %1208 = vst [vmem:[%s135 + $0x170] sm:$0xff] %v696
        %1209 = vst [vmem:[%s135 + $0x178] sm:$0xff] %v697
        %1210 = vst [vmem:[%s135 + $0x180] sm:$0xff] %v698
        %1211 = vst [vmem:[%s135 + $0x188] sm:$0xff] %v699
        %1212 = vst [vmem:[%s135 + $0x190] sm:$0xff] %v700
        %1213 = vst [vmem:[%s135 + $0x198] sm:$0xff] %v701
        %1214 = vst [vmem:[%s135 + $0x1a0] sm:$0xff] %v702
        %1215 = vst [vmem:[%s135 + $0x1a8] sm:$0xff] %v703
        %1216 = vst [vmem:[%s135 + $0x1b0] sm:$0xff] %v704
        %1217 = vst [vmem:[%s135 + $0x1b8] sm:$0xff] %v705
        %1218 = vst [vmem:[%s135 + $0x1c0] sm:$0xff] %v706
        %1219 = vst [vmem:[%s135 + $0x1c8] sm:$0xff] %v707
        %1220 = vst [vmem:[%s135 + $0x1d0] sm:$0xff] %v708
        %1221 = vst [vmem:[%s135 + $0x1d8] sm:$0xff] %v709
        %1222 = vst [vmem:[%s135 + $0x1e0] sm:$0xff] %v710
        %1223 = vst [vmem:[%s135 + $0x1e8] sm:$0xff] %v711
        %1224 = vst [vmem:[%s135 + $0x1f0] sm:$0xff] %v712
        %1225 = vst [vmem:[%s135 + $0x1f8] sm:$0xff] %v713
        %1226 = vst [vmem:[%s135 + $0x200] sm:$0xff] %v714
        %1227 = vst [vmem:[%s135 + $0x208] sm:$0xff] %v715
        %1228 = vst [vmem:[%s135 + $0x210] sm:$0xff] %v716
        %1229 = vst [vmem:[%s135 + $0x218] sm:$0xff] %v717
        %1230 = vst [vmem:[%s135 + $0x220] sm:$0xff] %v718
        %1231 = vst [vmem:[%s135 + $0x228] sm:$0xff] %v719
        %1232 = vst [vmem:[%s135 + $0x230] sm:$0xff] %v720
        %1233 = vst [vmem:[%s135 + $0x238] sm:$0xff] %v721
        %1234 = vst [vmem:[%s135 + $0x240] sm:$0xff] %v722
        %1235 = vst [vmem:[%s135 + $0x248] sm:$0xff] %v723
        %1236 = vst [vmem:[%s135 + $0x250] sm:$0xff] %v724
        %1237 = vst [vmem:[%s135 + $0x258] sm:$0xff] %v725
        %1238 = vst [vmem:[%s135 + $0x260] sm:$0xff] %v726
        %1239 = vst [vmem:[%s135 + $0x268] sm:$0xff] %v727
        %1240 = vst [vmem:[%s135 + $0x270] sm:$0xff] %v728
        %1241 = vst [vmem:[%s135 + $0x278] sm:$0xff] %v729
        %1242 = vst [vmem:[%s135 + $0x280] sm:$0xff] %v730
        %1243 = vst [vmem:[%s135 + $0x288] sm:$0xff] %v731
        %1244 = vst [vmem:[%s135 + $0x290] sm:$0xff] %v732
        %1245 = vst [vmem:[%s135 + $0x298] sm:$0xff] %v733
        %1246 = vst [vmem:[%s135 + $0x2a0] sm:$0xff] %v734
        %1247 = vst [vmem:[%s135 + $0x2a8] sm:$0xff] %v735
        %1248 = vst [vmem:[%s135 + $0x2b0] sm:$0xff] %v736
        %1249 = vst [vmem:[%s135 + $0x2b8] sm:$0xff] %v737
        %1250 = vst [vmem:[%s135 + $0x2c0] sm:$0xff] %v738
        %1251 = vst [vmem:[%s135 + $0x2c8] sm:$0xff] %v739
        %1252 = vst [vmem:[%s135 + $0x2d0] sm:$0xff] %v740
        %1253 = vst [vmem:[%s135 + $0x2d8] sm:$0xff] %v741
        %1254 = vst [vmem:[%s135 + $0x2e0] sm:$0xff] %v742
        %1255 = vst [vmem:[%s135 + $0x2e8] sm:$0xff] %v743
        %1256 = vst [vmem:[%s135 + $0x2f0] sm:$0xff] %v744
        %1257 = vst [vmem:[%s135 + $0x2f8] sm:$0xff] %v745
        %1258 = vst [vmem:[%s135 + $0x300] sm:$0xff] %v746
        %1259 = vst [vmem:[%s135 + $0x308] sm:$0xff] %v747
        %1260 = vst [vmem:[%s135 + $0x310] sm:$0xff] %v748
        %1261 = vst [vmem:[%s135 + $0x318] sm:$0xff] %v749
        %1262 = vst [vmem:[%s135 + $0x320] sm:$0xff] %v750
        %1263 = vst [vmem:[%s135 + $0x328] sm:$0xff] %v751
        %1264 = vst [vmem:[%s135 + $0x330] sm:$0xff] %v752
        %1265 = vst [vmem:[%s135 + $0x338] sm:$0xff] %v753
        %1266 = vst [vmem:[%s135 + $0x340] sm:$0xff] %v754
        %1267 = vst [vmem:[%s135 + $0x348] sm:$0xff] %v755
        %1268 = vst [vmem:[%s135 + $0x350] sm:$0xff] %v756
        %1269 = vst [vmem:[%s135 + $0x358] sm:$0xff] %v757
        %1270 = vst [vmem:[%s135 + $0x360] sm:$0xff] %v758
        %1271 = vst [vmem:[%s135 + $0x368] sm:$0xff] %v759
        %1272 = vst [vmem:[%s135 + $0x370] sm:$0xff] %v760
        %1273 = vst [vmem:[%s135 + $0x378] sm:$0xff] %v761
        %1274 = vst [vmem:[%s135 + $0x380] sm:$0xff] %v762
        %1275 = vst [vmem:[%s135 + $0x388] sm:$0xff] %v763
        %1276 = vst [vmem:[%s135 + $0x390] sm:$0xff] %v764
        %1277 = vst [vmem:[%s135 + $0x398] sm:$0xff] %v765
        %1278 = vst [vmem:[%s135 + $0x3a0] sm:$0xff] %v766
        %1279 = vst [vmem:[%s135 + $0x3a8] sm:$0xff] %v767
        %1280 = vst [vmem:[%s135 + $0x3b0] sm:$0xff] %v768
        %1281 = vst [vmem:[%s135 + $0x3b8] sm:$0xff] %v769
        %1282 = vst [vmem:[%s135 + $0x3c0] sm:$0xff] %v770
        %1283 = vst [vmem:[%s135 + $0x3c8] sm:$0xff] %v771
        %1284 = vst [vmem:[%s135 + $0x3d0] sm:$0xff] %v772
        %1285 = vst [vmem:[%s135 + $0x3d8] sm:$0xff] %v773
        %1286 = vst [vmem:[%s135 + $0x3e0] sm:$0xff] %v774
        %1287 = vst [vmem:[%s135 + $0x3e8] sm:$0xff] %v775
        %1288 = vst [vmem:[%s135 + $0x3f0] sm:$0xff] %v776
        %1289 = vst [vmem:[%s135 + $0x3f8] sm:$0xff] %v777
        %1290 = vst [vmem:[%s135 + $0x400] sm:$0xff] %v778
        %1291 = vst [vmem:[%s135 + $0x408] sm:$0xff] %v779
        %1292 = vst [vmem:[%s135 + $0x410] sm:$0xff] %v780
        %1293 = vst [vmem:[%s135 + $0x418] sm:$0xff] %v781
        %1294 = vst [vmem:[%s135 + $0x420] sm:$0xff] %v782
        %1295 = vst [vmem:[%s135 + $0x428] sm:$0xff] %v783
        %1296 = vst [vmem:[%s135 + $0x430] sm:$0xff] %v784
        %1297 = vst [vmem:[%s135 + $0x438] sm:$0xff] %v785
        %1298 = vst [vmem:[%s135 + $0x440] sm:$0xff] %v786
        %1299 = vst [vmem:[%s135 + $0x448] sm:$0xff] %v787
        %1300 = vst [vmem:[%s135 + $0x450] sm:$0xff] %v788
        %1301 = vst [vmem:[%s135 + $0x458] sm:$0xff] %v789
        %1302 = vst [vmem:[%s135 + $0x460] sm:$0xff] %v790
        %1303 = vst [vmem:[%s135 + $0x468] sm:$0xff] %v791
        %1304 = vst [vmem:[%s135 + $0x470] sm:$0xff] %v792
        %1305 = vst [vmem:[%s135 + $0x478] sm:$0xff] %v793
        %1306 = vst [vmem:[%s135 + $0x480] sm:$0xff] %v794
        %1307 = vst [vmem:[%s135 + $0x488] sm:$0xff] %v795
        %1308 = vst [vmem:[%s135 + $0x490] sm:$0xff] %v796
        %1309 = vst [vmem:[%s135 + $0x498] sm:$0xff] %v797
        %1310 = vst [vmem:[%s135 + $0x4a0] sm:$0xff] %v798
        %1311 = vst [vmem:[%s135 + $0x4a8] sm:$0xff] %v799
        %1312 = vst [vmem:[%s135 + $0x4b0] sm:$0xff] %v800
        %1313 = vst [vmem:[%s135 + $0x4b8] sm:$0xff] %v801
        %1314 = vst [vmem:[%s135 + $0x4c0] sm:$0xff] %v802
        %1315 = vst [vmem:[%s135 + $0x4c8] sm:$0xff] %v803
        %1316 = vst [vmem:[%s135 + $0x4d0] sm:$0xff] %v804
        %1317 = vst [vmem:[%s135 + $0x4d8] sm:$0xff] %v805
        %1318 = vst [vmem:[%s135 + $0x4e0] sm:$0xff] %v806
        %1319 = vst [vmem:[%s135 + $0x4e8] sm:$0xff] %v807
        %1320 = vst [vmem:[%s135 + $0x4f0] sm:$0xff] %v808
        %1321 = vst [vmem:[%s135 + $0x4f8] sm:$0xff] %v809
        %1322 = vst [vmem:[%s135 + $0x500] sm:$0xff] %v810
        %1323 = vst [vmem:[%s135 + $0x508] sm:$0xff] %v811
        %1324 = vst [vmem:[%s135 + $0x510] sm:$0xff] %v812
        %1325 = vst [vmem:[%s135 + $0x518] sm:$0xff] %v813
        %1326 = vst [vmem:[%s135 + $0x520] sm:$0xff] %v814
        %1327 = vst [vmem:[%s135 + $0x528] sm:$0xff] %v815
        %1328 = vst [vmem:[%s135 + $0x530] sm:$0xff] %v816
        %1329 = vst [vmem:[%s135 + $0x538] sm:$0xff] %v817
        %1330 = vst [vmem:[%s135 + $0x540] sm:$0xff] %v818
        %1331 = vst [vmem:[%s135 + $0x548] sm:$0xff] %v819
        %1332 = vst [vmem:[%s135 + $0x550] sm:$0xff] %v820
        %1333 = vst [vmem:[%s135 + $0x558] sm:$0xff] %v821
        %1334 = vst [vmem:[%s135 + $0x560] sm:$0xff] %v822
        %1335 = vst [vmem:[%s135 + $0x568] sm:$0xff] %v823
        %1336 = vst [vmem:[%s135 + $0x570] sm:$0xff] %v824
        %1337 = vst [vmem:[%s135 + $0x578] sm:$0xff] %v825
        %1338 = vst [vmem:[%s135 + $0x580] sm:$0xff] %v826
        %1339 = vst [vmem:[%s135 + $0x588] sm:$0xff] %v827
        %1340 = vst [vmem:[%s135 + $0x590] sm:$0xff] %v828
        %1341 = vst [vmem:[%s135 + $0x598] sm:$0xff] %v829
        %1342 = vst [vmem:[%s135 + $0x5a0] sm:$0xff] %v830
        %1343 = vst [vmem:[%s135 + $0x5a8] sm:$0xff] %v831
        %1344 = vst [vmem:[%s135 + $0x5b0] sm:$0xff] %v832
        %1345 = vst [vmem:[%s135 + $0x5b8] sm:$0xff] %v833
        %1346 = vst [vmem:[%s135 + $0x5c0] sm:$0xff] %v834
        %1347 = vst [vmem:[%s135 + $0x5c8] sm:$0xff] %v835
        %1348 = vst [vmem:[%s135 + $0x5d0] sm:$0xff] %v836
        %1349 = vst [vmem:[%s135 + $0x5d8] sm:$0xff] %v837
        %1350 = vst [vmem:[%s135 + $0x5e0] sm:$0xff] %v838
        %1351 = vst [vmem:[%s135 + $0x5e8] sm:$0xff] %v839
        %1352 = vst [vmem:[%s135 + $0x5f0] sm:$0xff] %v840
        %1353 = vst [vmem:[%s135 + $0x5f8] sm:$0xff] %v841
        %1354 = vst [vmem:[%s135 + $0x600] sm:$0xff] %v842
        %1355 = vst [vmem:[%s135 + $0x608] sm:$0xff] %v843
        %1356 = vst [vmem:[%s135 + $0x610] sm:$0xff] %v844
        %1357 = vst [vmem:[%s135 + $0x618] sm:$0xff] %v845
        %1358 = vst [vmem:[%s135 + $0x620] sm:$0xff] %v846
        %1359 = vst [vmem:[%s135 + $0x628] sm:$0xff] %v847
        %1360 = vst [vmem:[%s135 + $0x630] sm:$0xff] %v848
        %1361 = vst [vmem:[%s135 + $0x638] sm:$0xff] %v849
        %1362 = vst [vmem:[%s135 + $0x640] sm:$0xff] %v850
        %1363 = vst [vmem:[%s135 + $0x648] sm:$0xff] %v851
        %1364 = vst [vmem:[%s135 + $0x650] sm:$0xff] %v852
        %1365 = vst [vmem:[%s135 + $0x658] sm:$0xff] %v853
        %1366 = vst [vmem:[%s135 + $0x660] sm:$0xff] %v854
        %1367 = vst [vmem:[%s135 + $0x668] sm:$0xff] %v855
        %1368 = vst [vmem:[%s135 + $0x670] sm:$0xff] %v856
        %1369 = vst [vmem:[%s135 + $0x678] sm:$0xff] %v857
        %1370 = vst [vmem:[%s135 + $0x680] sm:$0xff] %v858
        %1371 = vst [vmem:[%s135 + $0x688] sm:$0xff] %v859
        %1372 = vst [vmem:[%s135 + $0x690] sm:$0xff] %v860
        %1373 = vst [vmem:[%s135 + $0x698] sm:$0xff] %v861
        %1374 = vst [vmem:[%s135 + $0x6a0] sm:$0xff] %v862
        %1375 = vst [vmem:[%s135 + $0x6a8] sm:$0xff] %v863
        %1376 = vst [vmem:[%s135 + $0x6b0] sm:$0xff] %v864
        %1377 = vst [vmem:[%s135 + $0x6b8] sm:$0xff] %v865
        %1378 = vst [vmem:[%s135 + $0x6c0] sm:$0xff] %v866
        %1379 = vst [vmem:[%s135 + $0x6c8] sm:$0xff] %v867
        %1380 = vst [vmem:[%s135 + $0x6d0] sm:$0xff] %v868
        %1381 = vst [vmem:[%s135 + $0x6d8] sm:$0xff] %v869
        %1382 = vst [vmem:[%s135 + $0x6e0] sm:$0xff] %v870
        %1383 = vst [vmem:[%s135 + $0x6e8] sm:$0xff] %v871
        %1384 = vst [vmem:[%s135 + $0x6f0] sm:$0xff] %v872
        %1385 = vst [vmem:[%s135 + $0x6f8] sm:$0xff] %v873
        %1386 = vst [vmem:[%s135 + $0x700] sm:$0xff] %v874
        %1387 = vst [vmem:[%s135 + $0x708] sm:$0xff] %v875
        %1388 = vst [vmem:[%s135 + $0x710] sm:$0xff] %v876
        %1389 = vst [vmem:[%s135 + $0x718] sm:$0xff] %v877
        %1390 = vst [vmem:[%s135 + $0x720] sm:$0xff] %v878
        %1391 = vst [vmem:[%s135 + $0x728] sm:$0xff] %v879
        %1392 = vst [vmem:[%s135 + $0x730] sm:$0xff] %v880
        %1393 = vst [vmem:[%s135 + $0x738] sm:$0xff] %v881
        %1394 = vst [vmem:[%s135 + $0x740] sm:$0xff] %v882
        %1395 = vst [vmem:[%s135 + $0x748] sm:$0xff] %v883
        %1396 = vst [vmem:[%s135 + $0x750] sm:$0xff] %v884
        %1397 = vst [vmem:[%s135 + $0x758] sm:$0xff] %v885
        %1398 = vst [vmem:[%s135 + $0x760] sm:$0xff] %v886
        %1399 = vst [vmem:[%s135 + $0x768] sm:$0xff] %v887
        %1400 = vst [vmem:[%s135 + $0x770] sm:$0xff] %v888
        %1401 = vst [vmem:[%s135 + $0x778] sm:$0xff] %v889
        %1402 = vst [vmem:[%s135 + $0x780] sm:$0xff] %v890
        %1403 = vst [vmem:[%s135 + $0x788] sm:$0xff] %v891
        %1404 = vst [vmem:[%s135 + $0x790] sm:$0xff] %v892
        %1405 = vst [vmem:[%s135 + $0x798] sm:$0xff] %v893
        %1406 = vst [vmem:[%s135 + $0x7a0] sm:$0xff] %v894
        %1407 = vst [vmem:[%s135 + $0x7a8] sm:$0xff] %v895
        %1408 = vst [vmem:[%s135 + $0x7b0] sm:$0xff] %v896
        %1409 = vst [vmem:[%s135 + $0x7b8] sm:$0xff] %v897
        %1410 = vst [vmem:[%s135 + $0x7c0] sm:$0xff] %v898
        %1411 = vst [vmem:[%s135 + $0x7c8] sm:$0xff] %v899
        %1412 = vst [vmem:[%s135 + $0x7d0] sm:$0xff] %v900
        %1413 = vst [vmem:[%s135 + $0x7d8] sm:$0xff] %v901
        %1414 = vst [vmem:[%s135 + $0x7e0] sm:$0xff] %v902
        %1415 = vst [vmem:[%s135 + $0x7e8] sm:$0xff] %v903
        %1416 = vst [vmem:[%s135 + $0x7f0] sm:$0xff] %v904
        %1417 = vst [vmem:[%s135 + $0x7f8] sm:$0xff] %v905
        %1418 = vst [vmem:[%s135 + $0x800] sm:$0xff] %v906
        %1419 = vst [vmem:[%s135 + $0x808] sm:$0xff] %v907
        %1420 = vst [vmem:[%s135 + $0x810] sm:$0xff] %v908
        %1421 = vst [vmem:[%s135 + $0x818] sm:$0xff] %v909
        %1422 = vst [vmem:[%s135 + $0x820] sm:$0xff] %v910
        %1423 = vst [vmem:[%s135 + $0x828] sm:$0xff] %v911
        %1424 = vst [vmem:[%s135 + $0x830] sm:$0xff] %v912
        %1425 = vst [vmem:[%s135 + $0x838] sm:$0xff] %v913
        %1426 = vst [vmem:[%s135 + $0x840] sm:$0xff] %v914
        %1427 = vst [vmem:[%s135 + $0x848] sm:$0xff] %v915
        %1428 = vst [vmem:[%s135 + $0x850] sm:$0xff] %v916
        %1429 = vst [vmem:[%s135 + $0x858] sm:$0xff] %v917
        %1430 = vst [vmem:[%s135 + $0x860] sm:$0xff] %v918
        %1431 = vst [vmem:[%s135 + $0x868] sm:$0xff] %v919
        %1432 = vst [vmem:[%s135 + $0x870] sm:$0xff] %v920
        %1433 = vst [vmem:[%s135 + $0x878] sm:$0xff] %v921
        %1434 = vst [vmem:[%s135 + $0x880] sm:$0xff] %v922
        %1435 = vst [vmem:[%s135 + $0x888] sm:$0xff] %v923
        %1436 = vst [vmem:[%s135 + $0x890] sm:$0xff] %v924
        %1437 = vst [vmem:[%s135 + $0x898] sm:$0xff] %v925
        %1438 = vst [vmem:[%s135 + $0x8a0] sm:$0xff] %v926
        %1439 = vst [vmem:[%s135 + $0x8a8] sm:$0xff] %v927
        %1440 = vst [vmem:[%s135 + $0x8b0] sm:$0xff] %v928
        %1441 = vst [vmem:[%s135 + $0x8b8] sm:$0xff] %v929
        %1442 = vst [vmem:[%s135 + $0x8c0] sm:$0xff] %v930
        %1443 = vst [vmem:[%s135 + $0x8c8] sm:$0xff] %v931
        %1444 = vst [vmem:[%s135 + $0x8d0] sm:$0xff] %v932
        %1445 = vst [vmem:[%s135 + $0x8d8] sm:$0xff] %v933
        %1446 = vst [vmem:[%s135 + $0x8e0] sm:$0xff] %v934
        %1447 = vst [vmem:[%s135 + $0x8e8] sm:$0xff] %v935
        %1448 = vst [vmem:[%s135 + $0x8f0] sm:$0xff] %v936
        %1449 = vst [vmem:[%s135 + $0x8f8] sm:$0xff] %v937
        %1450 = vst [vmem:[%s135 + $0x900] sm:$0xff] %v938
        %1451 = vst [vmem:[%s135 + $0x908] sm:$0xff] %v939
        %1452 = vst [vmem:[%s135 + $0x910] sm:$0xff] %v940
        %1453 = vst [vmem:[%s135 + $0x918] sm:$0xff] %v941
        %1454 = vst [vmem:[%s135 + $0x920] sm:$0xff] %v942
        %1455 = vst [vmem:[%s135 + $0x928] sm:$0xff] %v943
        %1456 = vst [vmem:[%s135 + $0x930] sm:$0xff] %v944
        %1457 = vst [vmem:[%s135 + $0x938] sm:$0xff] %v945
        %1458 = vst [vmem:[%s135 + $0x940] sm:$0xff] %v946
        %1459 = vst [vmem:[%s135 + $0x948] sm:$0xff] %v947
        %1460 = vst [vmem:[%s135 + $0x950] sm:$0xff] %v948
        %1461 = vst [vmem:[%s135 + $0x958] sm:$0xff] %v949
        %1462 = vst [vmem:[%s135 + $0x960] sm:$0xff] %v950
        %1463 = vst [vmem:[%s135 + $0x968] sm:$0xff] %v951
        %1464 = vst [vmem:[%s135 + $0x970] sm:$0xff] %v952
        %1465 = vst [vmem:[%s135 + $0x978] sm:$0xff] %v953
        %1466 = vst [vmem:[%s135 + $0x980] sm:$0xff] %v954
        %1467 = vst [vmem:[%s135 + $0x988] sm:$0xff] %v955
        %1468 = vst [vmem:[%s135 + $0x990] sm:$0xff] %v956
        %1469 = vst [vmem:[%s135 + $0x998] sm:$0xff] %v957
        %1470 = vst [vmem:[%s135 + $0x9a0] sm:$0xff] %v958
        %1471 = vst [vmem:[%s135 + $0x9a8] sm:$0xff] %v959
        %1472 = vst [vmem:[%s135 + $0x9b0] sm:$0xff] %v960
        %1473 = vst [vmem:[%s135 + $0x9b8] sm:$0xff] %v961
        %1474 = vst [vmem:[%s135 + $0x9c0] sm:$0xff] %v962
        %1475 = vst [vmem:[%s135 + $0x9c8] sm:$0xff] %v963
        %1476 = vst [vmem:[%s135 + $0x9d0] sm:$0xff] %v964
        %1477 = vst [vmem:[%s135 + $0x9d8] sm:$0xff] %v965
        %1478 = vst [vmem:[%s135 + $0x9e0] sm:$0xff] %v966
        %1479 = vst [vmem:[%s135 + $0x9e8] sm:$0xff] %v967
        %1480 = vst [vmem:[%s135 + $0x9f0] sm:$0xff] %v968
        %1481 = vst [vmem:[%s135 + $0x9f8] sm:$0xff] %v969
        %1482 = vst [vmem:[%s135 + $0xa00] sm:$0xff] %v970
        %1483 = vst [vmem:[%s135 + $0xa08] sm:$0xff] %v971
        %1484 = vst [vmem:[%s135 + $0xa10] sm:$0xff] %v972
        %1485 = vst [vmem:[%s135 + $0xa18] sm:$0xff] %v973
        %1486 = vst [vmem:[%s135 + $0xa20] sm:$0xff] %v974
        %1487 = vst [vmem:[%s135 + $0xa28] sm:$0xff] %v975
        %1488 = vst [vmem:[%s135 + $0xa30] sm:$0xff] %v976
        %1489 = vst [vmem:[%s135 + $0xa38] sm:$0xff] %v977
        %1490 = vst [vmem:[%s135 + $0xa40] sm:$0xff] %v978
        %1491 = vst [vmem:[%s135 + $0xa48] sm:$0xff] %v979
        %1492 = vst [vmem:[%s135 + $0xa50] sm:$0xff] %v980
        %1493 = vst [vmem:[%s135 + $0xa58] sm:$0xff] %v981
        %1494 = vst [vmem:[%s135 + $0xa60] sm:$0xff] %v982
        %1495 = vst [vmem:[%s135 + $0xa68] sm:$0xff] %v983
        %1496 = vst [vmem:[%s135 + $0xa70] sm:$0xff] %v984
        %1497 = vst [vmem:[%s135 + $0xa78] sm:$0xff] %v985
        %1498 = vst [vmem:[%s135 + $0xa80] sm:$0xff] %v986
        %1499 = vst [vmem:[%s135 + $0xa88] sm:$0xff] %v987
        %1500 = vst [vmem:[%s135 + $0xa90] sm:$0xff] %v988
        %1501 = vst [vmem:[%s135 + $0xa98] sm:$0xff] %v989
        %1502 = vst [vmem:[%s135 + $0xaa0] sm:$0xff] %v990
        %1503 = vst [vmem:[%s135 + $0xaa8] sm:$0xff] %v991
        %1504 = vst [vmem:[%s135 + $0xab0] sm:$0xff] %v992
        %1505 = vst [vmem:[%s135 + $0xab8] sm:$0xff] %v993
        %1506 = vst [vmem:[%s135 + $0xac0] sm:$0xff] %v994
        %1507 = vst [vmem:[%s135 + $0xac8] sm:$0xff] %v995
        %1508 = vst [vmem:[%s135 + $0xad0] sm:$0xff] %v996
        %1509 = vst [vmem:[%s135 + $0xad8] sm:$0xff] %v997
        %1510 = vst [vmem:[%s135 + $0xae0] sm:$0xff] %v998
        %1511 = vst [vmem:[%s135 + $0xae8] sm:$0xff] %v999
        %1512 = vst [vmem:[%s135 + $0xaf0] sm:$0xff] %v1000
        %1513 = vst [vmem:[%s135 + $0xaf8] sm:$0xff] %v1001
        %1514 = vst [vmem:[%s135 + $0xb00] sm:$0xff] %v1002
        %1515 = vst [vmem:[%s135 + $0xb08] sm:$0xff] %v1003
        %1516 = vst [vmem:[%s135 + $0xb10] sm:$0xff] %v1004
        %1517 = vst [vmem:[%s135 + $0xb18] sm:$0xff] %v1005
        %1518 = vst [vmem:[%s135 + $0xb20] sm:$0xff] %v1006
        %1519 = vst [vmem:[%s135 + $0xb28] sm:$0xff] %v1007
        %1520 = vst [vmem:[%s135 + $0xb30] sm:$0xff] %v1008
        %1521 = vst [vmem:[%s135 + $0xb38] sm:$0xff] %v1009
        %1522 = vst [vmem:[%s135 + $0xb40] sm:$0xff] %v1010
        %1523 = vst [vmem:[%s135 + $0xb48] sm:$0xff] %v1011
        %1524 = vst [vmem:[%s135 + $0xb50] sm:$0xff] %v1012
        %1525 = vst [vmem:[%s135 + $0xb58] sm:$0xff] %v1013
        %1526 = vst [vmem:[%s135 + $0xb60] sm:$0xff] %v1014
        %1527 = vst [vmem:[%s135 + $0xb68] sm:$0xff] %v1015
        %1528 = vst [vmem:[%s135 + $0xb70] sm:$0xff] %v1016
        %1529 = vst [vmem:[%s135 + $0xb78] sm:$0xff] %v1017
        %1530 = vst [vmem:[%s135 + $0xb80] sm:$0xff] %v1018
        %1531 = vst [vmem:[%s135 + $0xb88] sm:$0xff] %v1019
        %1532 = vst [vmem:[%s135 + $0xb90] sm:$0xff] %v1020
        %1533 = vst [vmem:[%s135 + $0xb98] sm:$0xff] %v1021
        %1534 = vst [vmem:[%s135 + $0xba0] sm:$0xff] %v1022
        %1535 = vst [vmem:[%s135 + $0xba8] sm:$0xff] %v1023
        %1536 = vst [vmem:[%s135 + $0xbb0] sm:$0xff] %v1024
        %1537 = vst [vmem:[%s135 + $0xbb8] sm:$0xff] %v1025
        %1538 = vst [vmem:[%s135 + $0xbc0] sm:$0xff] %v1026
        %1539 = vst [vmem:[%s135 + $0xbc8] sm:$0xff] %v1027
        %1540 = vst [vmem:[%s135 + $0xbd0] sm:$0xff] %v1028
        %1541 = vst [vmem:[%s135 + $0xbd8] sm:$0xff] %v1029
        %1542 = vst [vmem:[%s135 + $0xbe0] sm:$0xff] %v1030
        %1543 = vst [vmem:[%s135 + $0xbe8] sm:$0xff] %v1031
        %1544 = vst [vmem:[%s135 + $0xbf0] sm:$0xff] %v1032
        %1545 = vst [vmem:[%s135 + $0xbf8] sm:$0xff] %v1033
        %1546 = vst [vmem:[%s135 + $0xc00] sm:$0xff] %v1034
        %1547 = vst [vmem:[%s135 + $0xc08] sm:$0xff] %v1035
        %1548 = vst [vmem:[%s135 + $0xc10] sm:$0xff] %v1036
        %1549 = vst [vmem:[%s135 + $0xc18] sm:$0xff] %v1037
        %1550 = vst [vmem:[%s135 + $0xc20] sm:$0xff] %v1038
        %1551 = vst [vmem:[%s135 + $0xc28] sm:$0xff] %v1039
        %1552 = vst [vmem:[%s135 + $0xc30] sm:$0xff] %v1040
        %1553 = vst [vmem:[%s135 + $0xc38] sm:$0xff] %v1041
        %1554 = vst [vmem:[%s135 + $0xc40] sm:$0xff] %v1042
        %1555 = vst [vmem:[%s135 + $0xc48] sm:$0xff] %v1043
        %1556 = vst [vmem:[%s135 + $0xc50] sm:$0xff] %v1044
        %1557 = vst [vmem:[%s135 + $0xc58] sm:$0xff] %v1045
        %1558 = vst [vmem:[%s135 + $0xc60] sm:$0xff] %v1046
        %1559 = vst [vmem:[%s135 + $0xc68] sm:$0xff] %v1047
        %1560 = vst [vmem:[%s135 + $0xc70] sm:$0xff] %v1048
        %1561 = vst [vmem:[%s135 + $0xc78] sm:$0xff] %v1049
        %1562 = vst [vmem:[%s135 + $0xc80] sm:$0xff] %v1050
        %1563 = vst [vmem:[%s135 + $0xc88] sm:$0xff] %v1051
        %1564 = vst [vmem:[%s135 + $0xc90] sm:$0xff] %v1052
        %1565 = vst [vmem:[%s135 + $0xc98] sm:$0xff] %v1053
        %1566 = vst [vmem:[%s135 + $0xca0] sm:$0xff] %v1054
        %1567 = vst [vmem:[%s135 + $0xca8] sm:$0xff] %v1055
        %1568 = vst [vmem:[%s135 + $0xcb0] sm:$0xff] %v1056
        %1569 = vst [vmem:[%s135 + $0xcb8] sm:$0xff] %v1057
        %1570 = vst [vmem:[%s135 + $0xcc0] sm:$0xff] %v1058
        %1571 = vst [vmem:[%s135 + $0xcc8] sm:$0xff] %v1059
        %1572 = vst [vmem:[%s135 + $0xcd0] sm:$0xff] %v1060
        %1573 = vst [vmem:[%s135 + $0xcd8] sm:$0xff] %v1061
        %1574 = vst [vmem:[%s135 + $0xce0] sm:$0xff] %v1062
        %1575 = vst [vmem:[%s135 + $0xce8] sm:$0xff] %v1063
        %1576 = vst [vmem:[%s135 + $0xcf0] sm:$0xff] %v1064
        %1577 = vst [vmem:[%s135 + $0xcf8] sm:$0xff] %v1065
        %1578 = vst [vmem:[%s135 + $0xd00] sm:$0xff] %v1066
        %1579 = vst [vmem:[%s135 + $0xd08] sm:$0xff] %v1067
        %1580 = vst [vmem:[%s135 + $0xd10] sm:$0xff] %v1068
        %1581 = vst [vmem:[%s135 + $0xd18] sm:$0xff] %v1069
        %1582 = vst [vmem:[%s135 + $0xd20] sm:$0xff] %v1070
        %1583 = vst [vmem:[%s135 + $0xd28] sm:$0xff] %v1071
        %1584 = vst [vmem:[%s135 + $0xd30] sm:$0xff] %v1072
        %1585 = vst [vmem:[%s135 + $0xd38] sm:$0xff] %v1073
        %1586 = vst [vmem:[%s135 + $0xd40] sm:$0xff] %v1074
        %1587 = vst [vmem:[%s135 + $0xd48] sm:$0xff] %v1075
        %1588 = vst [vmem:[%s135 + $0xd50] sm:$0xff] %v1076
        %1589 = vst [vmem:[%s135 + $0xd58] sm:$0xff] %v1077
        %1590 = vst [vmem:[%s135 + $0xd60] sm:$0xff] %v1078
        %1591 = vst [vmem:[%s135 + $0xd68] sm:$0xff] %v1079
        %1592 = vst [vmem:[%s135 + $0xd70] sm:$0xff] %v1080
        %1593 = vst [vmem:[%s135 + $0xd78] sm:$0xff] %v1081
        %1594 = vst [vmem:[%s135 + $0xd80] sm:$0xff] %v1082
        %1595 = vst [vmem:[%s135 + $0xd88] sm:$0xff] %v1083
        %1596 = vst [vmem:[%s135 + $0xd90] sm:$0xff] %v1084
        %1597 = vst [vmem:[%s135 + $0xd98] sm:$0xff] %v1085
        %1598 = vst [vmem:[%s135 + $0xda0] sm:$0xff] %v1086
        %1599 = vst [vmem:[%s135 + $0xda8] sm:$0xff] %v1087
        %1600 = vst [vmem:[%s135 + $0xdb0] sm:$0xff] %v1088
        %1601 = vst [vmem:[%s135 + $0xdb8] sm:$0xff] %v1089
        %1602 = vst [vmem:[%s135 + $0xdc0] sm:$0xff] %v1090
        %1603 = vst [vmem:[%s135 + $0xdc8] sm:$0xff] %v1091
        %1604 = vst [vmem:[%s135 + $0xdd0] sm:$0xff] %v1092
        %1605 = vst [vmem:[%s135 + $0xdd8] sm:$0xff] %v1093
        %1606 = vst [vmem:[%s135 + $0xde0] sm:$0xff] %v1094
        %1607 = vst [vmem:[%s135 + $0xde8] sm:$0xff] %v1095
        %1608 = vst [vmem:[%s135 + $0xdf0] sm:$0xff] %v1096
        %1609 = vst [vmem:[%s135 + $0xdf8] sm:$0xff] %v1097
        %1610 = vst [vmem:[%s135 + $0xe00] sm:$0xff] %v1098
        %1611 = vst [vmem:[%s135 + $0xe08] sm:$0xff] %v1099
        %1612 = vst [vmem:[%s135 + $0xe10] sm:$0xff] %v1100
        %1613 = vst [vmem:[%s135 + $0xe18] sm:$0xff] %v1101
        %1614 = vst [vmem:[%s135 + $0xe20] sm:$0xff] %v1102
        %1615 = vst [vmem:[%s135 + $0xe28] sm:$0xff] %v1103
        %1616 = vst [vmem:[%s135 + $0xe30] sm:$0xff] %v1104
        %1617 = vst [vmem:[%s135 + $0xe38] sm:$0xff] %v1105
        %1618 = vst [vmem:[%s135 + $0xe40] sm:$0xff] %v1106
        %1619 = vst [vmem:[%s135 + $0xe48] sm:$0xff] %v1107
        %1620 = vst [vmem:[%s135 + $0xe50] sm:$0xff] %v1108
        %1621 = vst [vmem:[%s135 + $0xe58] sm:$0xff] %v1109
        %1622 = vst [vmem:[%s135 + $0xe60] sm:$0xff] %v1110
        %1623 = vst [vmem:[%s135 + $0xe68] sm:$0xff] %v1111
        %1624 = vst [vmem:[%s135 + $0xe70] sm:$0xff] %v1112
        %1625 = vst [vmem:[%s135 + $0xe78] sm:$0xff] %v1113
        %1626 = vst [vmem:[%s135 + $0xe80] sm:$0xff] %v1114
        %1627 = vst [vmem:[%s135 + $0xe88] sm:$0xff] %v1115
        %1628 = vst [vmem:[%s135 + $0xe90] sm:$0xff] %v1116
        %1629 = vst [vmem:[%s135 + $0xe98] sm:$0xff] %v1117
        %1630 = vst [vmem:[%s135 + $0xea0] sm:$0xff] %v1118
        %1631 = vst [vmem:[%s135 + $0xea8] sm:$0xff] %v1119
        %1632 = vst [vmem:[%s135 + $0xeb0] sm:$0xff] %v1120
        %1633 = vst [vmem:[%s135 + $0xeb8] sm:$0xff] %v1121
        %1634 = vst [vmem:[%s135 + $0xec0] sm:$0xff] %v1122
        %1635 = vst [vmem:[%s135 + $0xec8] sm:$0xff] %v1123
        %1636 = vst [vmem:[%s135 + $0xed0] sm:$0xff] %v1124
        %1637 = vst [vmem:[%s135 + $0xed8] sm:$0xff] %v1125
        %1638 = vst [vmem:[%s135 + $0xee0] sm:$0xff] %v1126
        %1639 = vst [vmem:[%s135 + $0xee8] sm:$0xff] %v1127
        %1640 = vst [vmem:[%s135 + $0xef0] sm:$0xff] %v1128
        %1641 = vst [vmem:[%s135 + $0xef8] sm:$0xff] %v1129
        %1642 = vst [vmem:[%s135 + $0xf00] sm:$0xff] %v1130
        %1643 = vst [vmem:[%s135 + $0xf08] sm:$0xff] %v1131
        %1644 = vst [vmem:[%s135 + $0xf10] sm:$0xff] %v1132
        %1645 = vst [vmem:[%s135 + $0xf18] sm:$0xff] %v1133
        %1646 = vst [vmem:[%s135 + $0xf20] sm:$0xff] %v1134
        %1647 = vst [vmem:[%s135 + $0xf28] sm:$0xff] %v1135
        %1648 = vst [vmem:[%s135 + $0xf30] sm:$0xff] %v1136
        %1649 = vst [vmem:[%s135 + $0xf38] sm:$0xff] %v1137
        %1650 = vst [vmem:[%s135 + $0xf40] sm:$0xff] %v1138
        %1651 = vst [vmem:[%s135 + $0xf48] sm:$0xff] %v1139
        %1652 = vst [vmem:[%s135 + $0xf50] sm:$0xff] %v1140
        %1653 = vst [vmem:[%s135 + $0xf58] sm:$0xff] %v1141
        %1654 = vst [vmem:[%s135 + $0xf60] sm:$0xff] %v1142
        %1655 = vst [vmem:[%s135 + $0xf68] sm:$0xff] %v1143
        %1656 = vst [vmem:[%s135 + $0xf70] sm:$0xff] %v1144
        %1657 = vst [vmem:[%s135 + $0xf78] sm:$0xff] %v1145
        %1658 = vst [vmem:[%s135 + $0xf80] sm:$0xff] %v1146
        %1659 = vst [vmem:[%s135 + $0xf88] sm:$0xff] %v1147
        %1660 = vst [vmem:[%s135 + $0xf90] sm:$0xff] %v1148
        %1661 = vst [vmem:[%s135 + $0xf98] sm:$0xff] %v1149
        %1662 = vst [vmem:[%s135 + $0xfa0] sm:$0xff] %v1150
        %1663 = vst [vmem:[%s135 + $0xfa8] sm:$0xff] %v1151
        %1664 = vst [vmem:[%s135 + $0xfb0] sm:$0xff] %v1152
        %1665 = vst [vmem:[%s135 + $0xfb8] sm:$0xff] %v1153
        %1666 = vst [vmem:[%s135 + $0xfc0] sm:$0xff] %v1154
        %1667 = vst [vmem:[%s135 + $0xfc8] sm:$0xff] %v1155
        %1668 = vst [vmem:[%s135 + $0xfd0] sm:$0xff] %v1156
        %1669 = vst [vmem:[%s135 + $0xfd8] sm:$0xff] %v1157
        %1670 = vst [vmem:[%s135 + $0xfe0] sm:$0xff] %v1158
        %1671 = vst [vmem:[%s135 + $0xfe8] sm:$0xff] %v1159
        %1672 = vst [vmem:[%s135 + $0xff0] sm:$0xff] %v1160
        %1673 = vst [vmem:[%s135 + $0xff8] sm:$0xff] %v1161
        %s1674 = sand.u32 %s52, 1
        %s1675 = scalar_lea.sflag [#allocation4], %s1674
        %s1676 = sand.u32 %s52, 1
        %s1677 = smul.addr %s1676, 4096
        %s1678 = scalar_lea.vmem [#allocation5], %s1677
        // Predicated region
        $region29: #{tpu_custom_call.1} parent=23 // pred_check
          %p1679 = pneg %p62
        $region30: #{tpu_custom_call.1} parent=23 // pred_check_branch
          %1681 = sbr.rel (%p1679) target = $region32
        $region31: #{tpu_custom_call.1} parent=23 // pred_region
          %s1682 = smul.u32 128, %s18
          %s1684 = ssub.s32 65536, 65536
          %1685 = vsyncadd %s1675, %s1684
          %s1686 = smul.addr %s1682, 4
          %s1687 = smul.addr %s1686, 128
          %s1688 = scalar_lea.hbm %s1, %s1687
          %s1689 = sshll.u32 %s1678, 4
          %s1690 = int_to_ptr.vmem [resolvable:$true] %s1689
          %1695 = dma.vmem_to_hbm [thread:$0]  %s1690, 65536, %s1688, %s1675, 512, 512, 32
        $region32: #{tpu_custom_call.1} parent=23 // pred_fallthru
          _
      $region24: #{tpu_custom_call.1} parent=5 // pred_fallthru
        _
      %p1696 = scmp.le.s32.totalorder 2, %s13
      // Predicated region
      $region33: #{tpu_custom_call.1} parent=5 // pred_check
        %p1697 = pneg %p1696
      $region34: #{tpu_custom_call.1} parent=5 // pred_check_branch
        %1699 = sbr.rel (%p1697) target = $region36
      $region35: #{tpu_custom_call.1} parent=5 // pred_region
        %s1700 = ssub.s32 %s13, 2
        // Predicated region
        $region37: #{tpu_custom_call.1} parent=35 // pred_check
          %p1701 = pneg %p68
        $region38: #{tpu_custom_call.1} parent=35 // pred_check_branch
          %1703 = sbr.rel (%p1701) target = $region40
        $region39: #{tpu_custom_call.1} parent=35 // pred_region
          %s1704 = sand.u32 %s53, 1
          %s1705 = scalar_lea.sflag [#allocation4], %s1704
          %s1706 = sand.u32 %s53, 1
          %s1707 = smul.addr %s1706, 4096
          %s1708 = scalar_lea.vmem [#allocation5], %s1707
          %1709 = dma.done %s1705, 65536
        $region40: #{tpu_custom_call.1} parent=35 // pred_fallthru
          _
      $region36: #{tpu_custom_call.1} parent=5 // pred_fallthru
        _
    $region6: #{tpu_custom_call.1} parent=1 // loop_footer
      %s17 = sadd.s32 1, %s13
    $region7: #{tpu_custom_call.1} parent=1 // loop_footer_branch
      %12 = sbr.rel target = $region3
    $region8: #{tpu_custom_call.1} parent=1 // loop_exit
      _
    %1710 = vsyncpa [#allocation3], 1
    %s1711 = scalar_lea.sflag [#allocation3], 1
    %1712 = vsyncpa %s1711, 1
    %1713 = vsyncpa [#allocation4], 1
    %s1714 = scalar_lea.sflag [#allocation4], 1
    %1715 = vsyncpa %s1714, 1

</llo_original>
